<compile_context>
chip_gen: v5e
topology: v5e:2x2
jax: 0.10.0
libtpu: 0.0.40
codegen_flags: <defaults>
</compile_context>

<pallas_src>
import math

import jax
import jax.numpy as jnp
from jax import lax
from jax.experimental import pallas as pl
from jax.experimental.pallas import tpu as pltpu

# ---------------- problem sizes (small, consistent with the module) ----------------
B = 2          # batch
TQ = 8         # decoder query length
TK = 8         # decoder keys length (self-attention memory)
TS = 8         # encoder states length
D = 32         # hidden_size
H = 4          # num_attention_heads
DH = D // H    # head dim
INNER = 128    # inner_size of the FFN
EPS = 1e-5
NEG_INF = -10000.0
LANES = 128
BF = jnp.bfloat16

# ---- packed bf16 weight slab row offsets (multiples of 16 -> bf16-tile aligned) ----
_W_FF1 = 0            # (D, INNER)   dense 128 lanes
_W_QKV1 = D           # (D, 3D)      [Wq*scale | Wk | Wv]  self-attn
_W_QKV2 = 2 * D       # (D, 3D)      cross-attn
_W_FF2 = 3 * D        # (INNER, D)   lanes D:128 zero
_W_ROWS = 3 * D + INNER   # 224

# ---- packed f32 bias / LayerNorm / out-proj slab rows ----
(_V_BQKV1, _V_BO1, _V_BQKV2, _V_BO2, _V_BFF1, _V_BFF2,
 _V_G1, _V_BE1, _V_G2, _V_BE2, _V_G3, _V_BE3) = range(12)
_V_WO1 = 16           # (DH, H*D) head-major out-proj, self-attn
_V_WO2 = 24           # (DH, H*D) head-major out-proj, cross-attn
_V_ROWS = 32


# ================================ kernel helpers ================================
def _layernorm(x, gamma, beta):
    mu = jnp.mean(x, axis=-1, keepdims=True)
    xc = x - mu
    var = jnp.mean(xc * xc, axis=-1, keepdims=True)
    return xc * lax.rsqrt(var + EPS) * gamma + beta


def _softmax_last(s):
    m = jnp.max(s, axis=-1, keepdims=True)
    e = jnp.exp(s - m)
    d = jnp.sum(e, axis=-1, keepdims=True)
    r = pl.reciprocal(d, approx=True)     # EUP slot
    r = r * (2.0 - d * r)                 # one Newton step -> near-exact, cheap VPU
    return e * r


def _attend(q, k, v, mask, wo_hm):
    """Batch-folded multi-head attention (block-diagonal additive mask).

    q,k,v: (Nq, D) / (Nk, D) f32.  wo_hm: (DH, H*D) f32, head-major along lanes.
    Per-head out-projection is accumulated -> no lane concat of head contexts.
    """
    acc = None
    for h in range(H):                       # static 4-iteration loop
        lo = h * DH
        s = lax.dot_general(q[:, lo:lo + DH], k[:, lo:lo + DH],
                            (((1,), (1,)), ((), ())),
                            preferred_element_type=jnp.float32) + mask
        p = _softmax_last(s)
        ctx = jnp.dot(p, v[:, lo:lo + DH], preferred_element_type=jnp.float32)
        part = jnp.dot(ctx, wo_hm[:, h * D:(h + 1) * D],
                       preferred_element_type=jnp.float32)
        acc = part if acc is None else acc + part
    return acc


def _make_kernel(self_kv_is_q):
    def kernel(*refs):
        if self_kv_is_q:
            dq_ref, enc_ref, dmask_ref, emask_ref, w_ref, vec_ref, out_ref = refs
        else:
            dq_ref, dk_ref, enc_ref, dmask_ref, emask_ref, w_ref, vec_ref, out_ref = refs

        dq = dq_ref[...]        # (N, D) f32
        enc = enc_ref[...]      # (Ns, D) f32
        dmask = dmask_ref[...]  # (N, Nk) f32, block-diagonal additive
        emask = emask_ref[...]  # (N, Ns) f32

        # ---- static (free) slices of the bf16 weight slab ----
        wff1 = w_ref[_W_FF1:_W_FF1 + D, :]            # (D, INNER)
        wqkv1 = w_ref[_W_QKV1:_W_QKV1 + D, 0:3 * D]   # (D, 3D)
        wqkv2 = w_ref[_W_QKV2:_W_QKV2 + D, 0:3 * D]
        wff2 = w_ref[_W_FF2:_W_FF2 + INNER, 0:D]      # (INNER, D)

        # ---- static slices of the f32 bias / LN / out-proj slab ----
        bqkv1 = vec_ref[_V_BQKV1:_V_BQKV1 + 1, 0:3 * D]
        bo1 = vec_ref[_V_BO1:_V_BO1 + 1, 0:D]
        bqkv2 = vec_ref[_V_BQKV2:_V_BQKV2 + 1, 0:3 * D]
        bo2 = vec_ref[_V_BO2:_V_BO2 + 1, 0:D]
        bff1 = vec_ref[_V_BFF1:_V_BFF1 + 1, 0:INNER]
        bff2 = vec_ref[_V_BFF2:_V_BFF2 + 1, 0:D]
        g1 = vec_ref[_V_G1:_V_G1 + 1, 0:D]
        be1 = vec_ref[_V_BE1:_V_BE1 + 1, 0:D]
        g2 = vec_ref[_V_G2:_V_G2 + 1, 0:D]
        be2 = vec_ref[_V_BE2:_V_BE2 + 1, 0:D]
        g3 = vec_ref[_V_G3:_V_G3 + 1, 0:D]
        be3 = vec_ref[_V_BE3:_V_BE3 + 1, 0:D]
        wo1_hm = vec_ref[_V_WO1:_V_WO1 + DH, :]       # (DH, H*D) f32
        wo2_hm = vec_ref[_V_WO2:_V_WO2 + DH, :]

        # ---- self-attention (post-LN block) ----
        if self_kv_is_q:
            # fused Q/K/V: one (N,D)x(D,3D) bf16 MXU matmul
            qkv = jnp.dot(dq.astype(BF), wqkv1,
                          preferred_element_type=jnp.float32) + bqkv1
            q1, k1, v1 = qkv[:, 0:D], qkv[:, D:2 * D], qkv[:, 2 * D:3 * D]
        else:
            dk = dk_ref[...]
            q1 = jnp.dot(dq.astype(BF), wqkv1[:, 0:D],
                         preferred_element_type=jnp.float32) + bqkv1[:, 0:D]
            kv = jnp.dot(dk.astype(BF), wqkv1[:, D:3 * D],
                         preferred_element_type=jnp.float32) + bqkv1[:, D:3 * D]
            k1, v1 = kv[:, 0:D], kv[:, D:2 * D]
        sa = _attend(q1, k1, v1, dmask, wo1_hm) + bo1
        x1 = _layernorm(sa + dq, g1, be1)

        # ---- cross-attention ----
        q2 = jnp.dot(x1.astype(BF), wqkv2[:, 0:D],
                     preferred_element_type=jnp.float32) + bqkv2[:, 0:D]
        kv2 = jnp.dot(enc.astype(BF), wqkv2[:, D:3 * D],
                      preferred_element_type=jnp.float32) + bqkv2[:, D:3 * D]
        ca = _attend(q2, kv2[:, 0:D], kv2[:, D:2 * D], emask, wo2_hm) + bo2
        x2 = _layernorm(ca + x1, g2, be2)

        # ---- position-wise FFN ----
        hdn = jnp.maximum(jnp.dot(x2.astype(BF), wff1,
                                  preferred_element_type=jnp.float32) + bff1, 0.0)
        ff = jnp.dot(hdn.astype(BF), wff2,
                     preferred_element_type=jnp.float32) + bff2
        y = _layernorm(ff + x2, g3, be3)                        # (N, D)

        # lane-dense 128-lane store (host slices [:, :D])
        out_ref[...] = jnp.concatenate(
            [y, jnp.zeros((y.shape[0], LANES - D), jnp.float32)], axis=-1)

    return kernel


# ================================ host-side packing (ONCE) ================================
def _pad_lanes(w, width=LANES):
    return jnp.pad(w, ((0, 0), (0, width - w.shape[1])))


def _head_major(wo):
    """(D,D) torch-layout out-proj -> (DH, H*D): head h's (DH,D) block in lanes [h*D,(h+1)*D)."""
    wt = wo.T  # (in=D, out=D); head h consumes input rows [h*DH, (h+1)*DH)
    return jnp.concatenate([wt[h * DH:(h + 1) * DH, :] for h in range(H)], axis=1)


def _pack_params(p):
    scale = 1.0 / math.sqrt(DH)
    wqkv1 = jnp.concatenate([p["wq1"].T * scale, p["wk1"].T, p["wv1"].T], axis=1)  # (D,3D)
    wqkv2 = jnp.concatenate([p["wq2"].T * scale, p["wk2"].T, p["wv2"].T], axis=1)

    w_all = jnp.concatenate([
        p["wff1"].T,                 # rows [0, D)          (D, INNER) dense
        _pad_lanes(wqkv1),           # rows [D, 2D)
        _pad_lanes(wqkv2),           # rows [2D, 3D)
        _pad_lanes(p["wff2"].T),     # rows [3D, 3D+INNER)  (INNER, D)
    ], axis=0).astype(BF)            # (224, 128) bf16

    bqkv1 = jnp.concatenate([p["bq1"] * scale, p["bk1"], p["bv1"]], axis=1)  # (1, 3D)
    bqkv2 = jnp.concatenate([p["bq2"] * scale, p["bk2"], p["bv2"]], axis=1)
    rows = [bqkv1, p["bo1"], bqkv2, p["bo2"], p["bff1"], p["bff2"],
            p["g1"], p["be1"], p["g2"], p["be2"], p["g3"], p["be3"]]
    vecs = jnp.concatenate([_pad_lanes(r) for r in rows], axis=0)            # (12, 128)
    vecs = jnp.pad(vecs, ((0, _V_WO1 - vecs.shape[0]), (0, 0)))              # (16, 128)
    vecs = jnp.concatenate([vecs, _head_major(p["wo1"]), _head_major(p["wo2"])], axis=0)
    return w_all, vecs.astype(jnp.float32)                                   # (32, 128) f32


def _block_diag_mask(mask):
    """(B, Tq, Tk) additive mask -> (B*Tq, B*Tk) with -1e4 off the batch diagonal."""
    b, tq, tk = mask.shape
    same = jnp.arange(b)[:, None, None, None] == jnp.arange(b)[None, None, :, None]
    big = jnp.where(same, mask[:, :, None, :], NEG_INF)   # (b, tq, b, tk)
    return big.reshape(b * tq, b * tk).astype(jnp.float32)


def prepare_masks(decoder_mask, encoder_mask):
    """Build the batch-folded additive masks ONCE (masks are fixed across decode steps)."""
    dmask = _block_diag_mask(decoder_mask)
    emask = _block_diag_mask(encoder_mask)
    # batch-folded attention is only sensible while the token grid fits 128 lanes
    assert dmask.shape[0] <= LANES and dmask.shape[1] <= LANES, \
        "re-introduce a batch / kv-chunk grid axis beyond 128 flattened tokens"
    assert emask.shape[1] <= LANES
    return dmask, emask


def make_transformer_decoder_block(params, *, self_kv_is_q=True):
    """Pack weights once and return a jit'ed forward fn (pallas_call is the only device work)."""
    w_all, vecs = _pack_params(params)         # hoisted: runs once, not per call
    kernel = _make_kernel(self_kv_is_q)

    @jax.jit
    def fwd(decoder_query, decoder_mask_bd, decoder_keys, encoder_states, encoder_mask_bd):
        b, tq, d = decoder_query.shape
        n = b * tq
        dq = decoder_query.reshape(n, d)
        enc = encoder_states.reshape(-1, d)

        if self_kv_is_q:
            operands = (dq, enc, decoder_mask_bd, encoder_mask_bd, w_all, vecs)
        else:
            dk = decoder_keys.reshape(-1, d)
            operands = (dq, dk, enc, decoder_mask_bd, encoder_mask_bd, w_all, vecs)

        def full_spec(x):
            return pl.BlockSpec(x.shape, lambda i: (0, 0))

        # grid=(1,): the whole (B*T) token slab is one step.  When B*T grows, switch to a
        # row-block grid with dimension_semantics=("parallel",) to use both v7x TensorCores.
        out = pl.pallas_call(
            kernel,
            out_shape=jax.ShapeDtypeStruct((n, LANES), jnp.float32),
            grid_spec=pltpu.PrefetchScalarGridSpec(
                num_scalar_prefetch=0,
                grid=(1,),
                in_specs=[full_spec(x) for x in operands],
                out_specs=pl.BlockSpec((n, LANES), lambda i: (0, 0)),
            ),
            compiler_params=pltpu.CompilerParams(dimension_semantics=("arbitrary",)),
        )(*operands)
        return out[:, :d].reshape(b, tq, d)

    return fwd


# ---------------- pure-JAX reference (correctness check, f32 exact softmax) ----------------
def _mha_ref(q_in, k_in, v_in, mask, wq, bq, wk, bk, wv, bv, wo, bo):
    def proj(x, w, bias):
        y = jnp.einsum("btd,ed->bte", x, w) + bias
        bsz, t, _ = y.shape
        return y.reshape(bsz, t, H, DH).transpose(0, 2, 1, 3)
    q, k, v = proj(q_in, wq, bq), proj(k_in, wk, bk), proj(v_in, wv, bv)
    scores = jnp.einsum("bhqd,bhkd->bhqk", q, k) / math.sqrt(DH) + mask[:, None]
    probs = jax.nn.softmax(scores, axis=-1)
    ctx = jnp.einsum("bhqk,bhkd->bhqd", probs, v)
    ctx = ctx.transpose(0, 2, 1, 3).reshape(q_in.shape[0], q_in.shape[1], D)
    return jnp.einsum("btd,ed->bte", ctx, wo) + bo


def _ln_ref(x, g, b_):
    mu = jnp.mean(x, axis=-1, keepdims=True)
    var = jnp.mean((x - mu) ** 2, axis=-1, keepdims=True)
    return (x - mu) / jnp.sqrt(var + EPS) * g + b_


def reference_block(dq, dmask, dk, enc, emask, p):
    sa = _mha_ref(dq, dk, dk, dmask, p["wq1"], p["bq1"], p["wk1"], p["bk1"],
                  p["wv1"], p["bv1"], p["wo1"], p["bo1"]) + dq
    sa = _ln_ref(sa, p["g1"], p["be1"])
    ca = _mha_ref(sa, enc, enc, emask, p["wq2"], p["bq2"], p["wk2"], p["bk2"],
                  p["wv2"], p["bv2"], p["wo2"], p["bo2"]) + sa
    ca = _ln_ref(ca, p["g2"], p["be2"])
    ff = jnp.maximum(jnp.einsum("btd,id->bti", ca, p["wff1"]) + p["bff1"], 0.0)
    ff = jnp.einsum("bti,di->btd", ff, p["wff2"]) + p["bff2"] + ca
    return _ln_ref(ff, p["g3"], p["be3"])


def init_params(key):
    ks = jax.random.split(key, 16)
    p = {}
    i = 0
    for name in ["wq1", "wk1", "wv1", "wo1", "wq2", "wk2", "wv2", "wo2"]:
        p[name] = 0.05 * jax.random.normal(ks[i], (D, D), jnp.float32); i += 1
        p["b" + name[1:]] = jnp.zeros((1, D), jnp.float32)
    p["wff1"] = 0.05 * jax.random.normal(ks[i], (INNER, D), jnp.float32); i += 1
    p["bff1"] = jnp.zeros((1, INNER), jnp.float32)
    p["wff2"] = 0.05 * jax.random.normal(ks[i], (D, INNER), jnp.float32); i += 1
    p["bff2"] = jnp.zeros((1, D), jnp.float32)
    for g, be, kk in [("g1", "be1", ks[i]), ("g2", "be2", ks[i + 1]), ("g3", "be3", ks[i + 2])]:
        p[g] = jnp.ones((1, D), jnp.float32) + 0.01 * jax.random.normal(kk, (1, D), jnp.float32)
        p[be] = jnp.zeros((1, D), jnp.float32)
    return p


if __name__ == "__main__":
    key = jax.random.PRNGKey(0)
    k1, k2, kp = jax.random.split(key, 3)

    decoder_query = jax.random.normal(k1, (B, TQ, D), jnp.float32)
    decoder_keys = decoder_query          # typical decoding: self-attention memory == queries
    encoder_states = jax.random.normal(k2, (B, TS, D), jnp.float32)

    # causal additive mask for decoder self-attention, no masking for cross-attention
    causal = jnp.tril(jnp.ones((TQ, TK), jnp.float32))
    decoder_mask = jnp.broadcast_to((1.0 - causal) * NEG_INF, (B, TQ, TK))
    encoder_mask = jnp.zeros((B, TQ, TS), jnp.float32)

    params = init_params(kp)

    # ---- one-time init work (weight packing, jit, mask folding) ----
    fwd = make_transformer_decoder_block(params, self_kv_is_q=True)
    dmask_bd, emask_bd = prepare_masks(decoder_mask, encoder_mask)

    # ---- per-call: one jitted pallas_call ----
    out = fwd(decoder_query, dmask_bd, decoder_keys, encoder_states, emask_bd)
    out = jax.block_until_ready(out)

    ref = reference_block(decoder_query, decoder_mask, decoder_keys,
                          encoder_states, encoder_mask, params)
    assert out.shape == (B, TQ, D)
    err = float(jnp.max(jnp.abs(out - ref)))
    # tolerance covers bf16 MXU inputs on the weight matmuls (f32 reference)
    assert err < 5e-2, err

    print("KERNEL_OK")
</pallas_src>

<mosaic_0001>
module attributes {stable_mosaic.version = 11 : i64} {
  func.func @kernel(%arg0: i32, %arg1: memref<16x32xf32, #tpu.memory_space<vmem>>, %arg2: memref<16x32xf32, #tpu.memory_space<vmem>>, %arg3: memref<16x16xf32, #tpu.memory_space<vmem>>, %arg4: memref<16x16xf32, #tpu.memory_space<vmem>>, %arg5: memref<224x128xbf16, #tpu.memory_space<vmem>>, %arg6: memref<32x128xf32, #tpu.memory_space<vmem>>, %arg7: memref<16x128xf32, #tpu.memory_space<vmem>>) attributes {dimension_semantics = [#tpu.dimension_semantics<arbitrary>], iteration_bounds = array<i64: 1>, scalar_prefetch = 0 : i64, scratch_operands = 0 : i64, tpu.core_type = #tpu.core_type<tc>, window_params = [{pipeline_mode = #tpu.pipeline_mode<synchronous>, transform_indices = @transform_0, window_bounds = array<i64: 16, 32>}, {pipeline_mode = #tpu.pipeline_mode<synchronous>, transform_indices = @transform_1, window_bounds = array<i64: 16, 32>}, {pipeline_mode = #tpu.pipeline_mode<synchronous>, transform_indices = @transform_2, window_bounds = array<i64: 16, 16>}, {pipeline_mode = #tpu.pipeline_mode<synchronous>, transform_indices = @transform_3, window_bounds = array<i64: 16, 16>}, {pipeline_mode = #tpu.pipeline_mode<synchronous>, transform_indices = @transform_4, window_bounds = array<i64: 224, 128>}, {pipeline_mode = #tpu.pipeline_mode<synchronous>, transform_indices = @transform_5, window_bounds = array<i64: 32, 128>}, {pipeline_mode = #tpu.pipeline_mode<synchronous>, transform_indices = @transform_6, window_bounds = array<i64: 16, 128>}]} {
    %c0 = arith.constant 0 : index
    %c0_0 = arith.constant 0 : index
    %0 = vector.load %arg1[%c0, %c0_0] : memref<16x32xf32, #tpu.memory_space<vmem>>, vector<16x32xf32>
    %c0_1 = arith.constant 0 : index
    %c0_2 = arith.constant 0 : index
    %1 = vector.load %arg2[%c0_1, %c0_2] : memref<16x32xf32, #tpu.memory_space<vmem>>, vector<16x32xf32>
    %c0_3 = arith.constant 0 : index
    %c0_4 = arith.constant 0 : index
    %2 = vector.load %arg3[%c0_3, %c0_4] : memref<16x16xf32, #tpu.memory_space<vmem>>, vector<16x16xf32>
    %c0_5 = arith.constant 0 : index
    %c0_6 = arith.constant 0 : index
    %3 = vector.load %arg4[%c0_5, %c0_6] : memref<16x16xf32, #tpu.memory_space<vmem>>, vector<16x16xf32>
    %c0_7 = arith.constant 0 : index
    %c0_8 = arith.constant 0 : index
    %4 = vector.load %arg5[%c0_7, %c0_8] : memref<224x128xbf16, #tpu.memory_space<vmem>>, vector<32x128xbf16>
    %c32 = arith.constant 32 : index
    %c0_9 = arith.constant 0 : index
    %5 = vector.load %arg5[%c32, %c0_9] : memref<224x128xbf16, #tpu.memory_space<vmem>>, vector<32x96xbf16>
    %c64 = arith.constant 64 : index
    %c0_10 = arith.constant 0 : index
    %6 = vector.load %arg5[%c64, %c0_10] : memref<224x128xbf16, #tpu.memory_space<vmem>>, vector<32x96xbf16>
    %c96 = arith.constant 96 : index
    %c0_11 = arith.constant 0 : index
    %7 = vector.load %arg5[%c96, %c0_11] : memref<224x128xbf16, #tpu.memory_space<vmem>>, vector<128x32xbf16>
    %c0_12 = arith.constant 0 : index
    %c0_13 = arith.constant 0 : index
    %8 = vector.load %arg6[%c0_12, %c0_13] : memref<32x128xf32, #tpu.memory_space<vmem>>, vector<1x96xf32>
    %c1 = arith.constant 1 : index
    %c0_14 = arith.constant 0 : index
    %9 = vector.load %arg6[%c1, %c0_14] : memref<32x128xf32, #tpu.memory_space<vmem>>, vector<1x32xf32>
    %c2 = arith.constant 2 : index
    %c0_15 = arith.constant 0 : index
    %10 = vector.load %arg6[%c2, %c0_15] : memref<32x128xf32, #tpu.memory_space<vmem>>, vector<1x96xf32>
    %c3 = arith.constant 3 : index
    %c0_16 = arith.constant 0 : index
    %11 = vector.load %arg6[%c3, %c0_16] : memref<32x128xf32, #tpu.memory_space<vmem>>, vector<1x32xf32>
    %c4 = arith.constant 4 : index
    %c0_17 = arith.constant 0 : index
    %12 = vector.load %arg6[%c4, %c0_17] : memref<32x128xf32, #tpu.memory_space<vmem>>, vector<1x128xf32>
    %c5 = arith.constant 5 : index
    %c0_18 = arith.constant 0 : index
    %13 = vector.load %arg6[%c5, %c0_18] : memref<32x128xf32, #tpu.memory_space<vmem>>, vector<1x32xf32>
    %c6 = arith.constant 6 : index
    %c0_19 = arith.constant 0 : index
    %14 = vector.load %arg6[%c6, %c0_19] : memref<32x128xf32, #tpu.memory_space<vmem>>, vector<1x32xf32>
    %c7 = arith.constant 7 : index
    %c0_20 = arith.constant 0 : index
    %15 = vector.load %arg6[%c7, %c0_20] : memref<32x128xf32, #tpu.memory_space<vmem>>, vector<1x32xf32>
    %c8 = arith.constant 8 : index
    %c0_21 = arith.constant 0 : index
    %16 = vector.load %arg6[%c8, %c0_21] : memref<32x128xf32, #tpu.memory_space<vmem>>, vector<1x32xf32>
    %c9 = arith.constant 9 : index
    %c0_22 = arith.constant 0 : index
    %17 = vector.load %arg6[%c9, %c0_22] : memref<32x128xf32, #tpu.memory_space<vmem>>, vector<1x32xf32>
    %c10 = arith.constant 10 : index
    %c0_23 = arith.constant 0 : index
    %18 = vector.load %arg6[%c10, %c0_23] : memref<32x128xf32, #tpu.memory_space<vmem>>, vector<1x32xf32>
    %c11 = arith.constant 11 : index
    %c0_24 = arith.constant 0 : index
    %19 = vector.load %arg6[%c11, %c0_24] : memref<32x128xf32, #tpu.memory_space<vmem>>, vector<1x32xf32>
    %c16 = arith.constant 16 : index
    %c0_25 = arith.constant 0 : index
    %20 = vector.load %arg6[%c16, %c0_25] : memref<32x128xf32, #tpu.memory_space<vmem>>, vector<8x128xf32>
    %c24 = arith.constant 24 : index
    %c0_26 = arith.constant 0 : index
    %21 = vector.load %arg6[%c24, %c0_26] : memref<32x128xf32, #tpu.memory_space<vmem>>, vector<8x128xf32>
    %22 = arith.truncf %0 : vector<16x32xf32> to vector<16x32xbf16>
    %cst = arith.constant dense<0.000000e+00> : vector<16x96xf32>
    %23 = tpu.matmul %22, %5, %cst {dimension_numbers = #tpu.dot_dimension_numbers<[1], [0], [0], [1], [0, 0, 1, 1], [], []>} : vector<16x32xbf16>, vector<32x96xbf16>, vector<16x96xf32> -> vector<16x96xf32>
    %24 = vector.broadcast %8 : vector<1x96xf32> to vector<16x96xf32>
    %25 = arith.addf %23, %24 : vector<16x96xf32>
    %26 = vector.extract_strided_slice %25 {offsets = [0, 0], sizes = [16, 32], strides = [1, 1]} : vector<16x96xf32> to vector<16x32xf32>
    %27 = vector.extract_strided_slice %25 {offsets = [0, 32], sizes = [16, 32], strides = [1, 1]} : vector<16x96xf32> to vector<16x32xf32>
    %28 = vector.extract_strided_slice %25 {offsets = [0, 64], sizes = [16, 32], strides = [1, 1]} : vector<16x96xf32> to vector<16x32xf32>
    %29 = vector.extract_strided_slice %26 {offsets = [0, 0], sizes = [16, 8], strides = [1, 1]} : vector<16x32xf32> to vector<16x8xf32>
    %30 = vector.extract_strided_slice %27 {offsets = [0, 0], sizes = [16, 8], strides = [1, 1]} : vector<16x32xf32> to vector<16x8xf32>
    %cst_27 = arith.constant dense<0.000000e+00> : vector<16x16xf32>
    %31 = tpu.matmul %29, %30, %cst_27 {dimension_numbers = #tpu.dot_dimension_numbers<[1], [1], [0], [0], [0, 0, 1, 0], [], []>} : vector<16x8xf32>, vector<16x8xf32>, vector<16x16xf32> -> vector<16x16xf32>
    %32 = arith.addf %31, %2 : vector<16x16xf32>
    %cst_28 = arith.constant dense<0xFF800000> : vector<16xf32>
    %33 = vector.multi_reduction <maximumf>, %32, %cst_28 [1] : vector<16x16xf32> to vector<16xf32>
    %34 = vector.shape_cast %33 : vector<16xf32> to vector<16x1xf32>
    %35 = vector.broadcast %34 : vector<16x1xf32> to vector<16x16xf32>
    %36 = arith.subf %32, %35 : vector<16x16xf32>
    %37 = math.exp %36 : vector<16x16xf32>
    %cst_29 = arith.constant dense<0.000000e+00> : vector<16xf32>
    %38 = vector.multi_reduction <add>, %37, %cst_29 [1] : vector<16x16xf32> to vector<16xf32>
    %39 = vector.shape_cast %38 : vector<16xf32> to vector<16x1xf32>
    %40 = tpu.reciprocal %39 {approx = true} : vector<16x1xf32> -> vector<16x1xf32>
    %41 = arith.mulf %39, %40 : vector<16x1xf32>
    %cst_30 = arith.constant 2.000000e+00 : f32
    %42 = vector.broadcast %cst_30 : f32 to vector<16x1xf32>
    %43 = arith.subf %42, %41 : vector<16x1xf32>
    %44 = arith.mulf %40, %43 : vector<16x1xf32>
    %45 = vector.broadcast %44 : vector<16x1xf32> to vector<16x16xf32>
    %46 = arith.mulf %37, %45 : vector<16x16xf32>
    %47 = vector.extract_strided_slice %28 {offsets = [0, 0], sizes = [16, 8], strides = [1, 1]} : vector<16x32xf32> to vector<16x8xf32>
    %cst_31 = arith.constant dense<0.000000e+00> : vector<16x8xf32>
    %48 = tpu.matmul %46, %47, %cst_31 {dimension_numbers = #tpu.dot_dimension_numbers<[1], [0], [0], [1], [0, 0, 1, 1], [], []>} : vector<16x16xf32>, vector<16x8xf32>, vector<16x8xf32> -> vector<16x8xf32>
    %49 = vector.extract_strided_slice %20 {offsets = [0, 0], sizes = [8, 32], strides = [1, 1]} : vector<8x128xf32> to vector<8x32xf32>
    %cst_32 = arith.constant dense<0.000000e+00> : vector<16x32xf32>
    %50 = tpu.matmul %48, %49, %cst_32 {dimension_numbers = #tpu.dot_dimension_numbers<[1], [0], [0], [1], [0, 0, 1, 1], [], []>} : vector<16x8xf32>, vector<8x32xf32>, vector<16x32xf32> -> vector<16x32xf32>
    %51 = vector.extract_strided_slice %26 {offsets = [0, 8], sizes = [16, 8], strides = [1, 1]} : vector<16x32xf32> to vector<16x8xf32>
    %52 = vector.extract_strided_slice %27 {offsets = [0, 8], sizes = [16, 8], strides = [1, 1]} : vector<16x32xf32> to vector<16x8xf32>
    %cst_33 = arith.constant dense<0.000000e+00> : vector<16x16xf32>
    %53 = tpu.matmul %51, %52, %cst_33 {dimension_numbers = #tpu.dot_dimension_numbers<[1], [1], [0], [0], [0, 0, 1, 0], [], []>} : vector<16x8xf32>, vector<16x8xf32>, vector<16x16xf32> -> vector<16x16xf32>
    %54 = arith.addf %53, %2 : vector<16x16xf32>
    %cst_34 = arith.constant dense<0xFF800000> : vector<16xf32>
    %55 = vector.multi_reduction <maximumf>, %54, %cst_34 [1] : vector<16x16xf32> to vector<16xf32>
    %56 = vector.shape_cast %55 : vector<16xf32> to vector<16x1xf32>
    %57 = vector.broadcast %56 : vector<16x1xf32> to vector<16x16xf32>
    %58 = arith.subf %54, %57 : vector<16x16xf32>
    %59 = math.exp %58 : vector<16x16xf32>
    %cst_35 = arith.constant dense<0.000000e+00> : vector<16xf32>
    %60 = vector.multi_reduction <add>, %59, %cst_35 [1] : vector<16x16xf32> to vector<16xf32>
    %61 = vector.shape_cast %60 : vector<16xf32> to vector<16x1xf32>
    %62 = tpu.reciprocal %61 {approx = true} : vector<16x1xf32> -> vector<16x1xf32>
    %63 = arith.mulf %61, %62 : vector<16x1xf32>
    %cst_36 = arith.constant 2.000000e+00 : f32
    %64 = vector.broadcast %cst_36 : f32 to vector<16x1xf32>
    %65 = arith.subf %64, %63 : vector<16x1xf32>
    %66 = arith.mulf %62, %65 : vector<16x1xf32>
    %67 = vector.broadcast %66 : vector<16x1xf32> to vector<16x16xf32>
    %68 = arith.mulf %59, %67 : vector<16x16xf32>
    %69 = vector.extract_strided_slice %28 {offsets = [0, 8], sizes = [16, 8], strides = [1, 1]} : vector<16x32xf32> to vector<16x8xf32>
    %cst_37 = arith.constant dense<0.000000e+00> : vector<16x8xf32>
    %70 = tpu.matmul %68, %69, %cst_37 {dimension_numbers = #tpu.dot_dimension_numbers<[1], [0], [0], [1], [0, 0, 1, 1], [], []>} : vector<16x16xf32>, vector<16x8xf32>, vector<16x8xf32> -> vector<16x8xf32>
    %71 = vector.extract_strided_slice %20 {offsets = [0, 32], sizes = [8, 32], strides = [1, 1]} : vector<8x128xf32> to vector<8x32xf32>
    %cst_38 = arith.constant dense<0.000000e+00> : vector<16x32xf32>
    %72 = tpu.matmul %70, %71, %cst_38 {dimension_numbers = #tpu.dot_dimension_numbers<[1], [0], [0], [1], [0, 0, 1, 1], [], []>} : vector<16x8xf32>, vector<8x32xf32>, vector<16x32xf32> -> vector<16x32xf32>
    %73 = arith.addf %50, %72 : vector<16x32xf32>
    %74 = vector.extract_strided_slice %26 {offsets = [0, 16], sizes = [16, 8], strides = [1, 1]} : vector<16x32xf32> to vector<16x8xf32>
    %75 = vector.extract_strided_slice %27 {offsets = [0, 16], sizes = [16, 8], strides = [1, 1]} : vector<16x32xf32> to vector<16x8xf32>
    %cst_39 = arith.constant dense<0.000000e+00> : vector<16x16xf32>
    %76 = tpu.matmul %74, %75, %cst_39 {dimension_numbers = #tpu.dot_dimension_numbers<[1], [1], [0], [0], [0, 0, 1, 0], [], []>} : vector<16x8xf32>, vector<16x8xf32>, vector<16x16xf32> -> vector<16x16xf32>
    %77 = arith.addf %76, %2 : vector<16x16xf32>
    %cst_40 = arith.constant dense<0xFF800000> : vector<16xf32>
    %78 = vector.multi_reduction <maximumf>, %77, %cst_40 [1] : vector<16x16xf32> to vector<16xf32>
    %79 = vector.shape_cast %78 : vector<16xf32> to vector<16x1xf32>
    %80 = vector.broadcast %79 : vector<16x1xf32> to vector<16x16xf32>
    %81 = arith.subf %77, %80 : vector<16x16xf32>
    %82 = math.exp %81 : vector<16x16xf32>
    %cst_41 = arith.constant dense<0.000000e+00> : vector<16xf32>
    %83 = vector.multi_reduction <add>, %82, %cst_41 [1] : vector<16x16xf32> to vector<16xf32>
    %84 = vector.shape_cast %83 : vector<16xf32> to vector<16x1xf32>
    %85 = tpu.reciprocal %84 {approx = true} : vector<16x1xf32> -> vector<16x1xf32>
    %86 = arith.mulf %84, %85 : vector<16x1xf32>
    %cst_42 = arith.constant 2.000000e+00 : f32
    %87 = vector.broadcast %cst_42 : f32 to vector<16x1xf32>
    %88 = arith.subf %87, %86 : vector<16x1xf32>
    %89 = arith.mulf %85, %88 : vector<16x1xf32>
    %90 = vector.broadcast %89 : vector<16x1xf32> to vector<16x16xf32>
    %91 = arith.mulf %82, %90 : vector<16x16xf32>
    %92 = vector.extract_strided_slice %28 {offsets = [0, 16], sizes = [16, 8], strides = [1, 1]} : vector<16x32xf32> to vector<16x8xf32>
    %cst_43 = arith.constant dense<0.000000e+00> : vector<16x8xf32>
    %93 = tpu.matmul %91, %92, %cst_43 {dimension_numbers = #tpu.dot_dimension_numbers<[1], [0], [0], [1], [0, 0, 1, 1], [], []>} : vector<16x16xf32>, vector<16x8xf32>, vector<16x8xf32> -> vector<16x8xf32>
    %94 = vector.extract_strided_slice %20 {offsets = [0, 64], sizes = [8, 32], strides = [1, 1]} : vector<8x128xf32> to vector<8x32xf32>
    %cst_44 = arith.constant dense<0.000000e+00> : vector<16x32xf32>
    %95 = tpu.matmul %93, %94, %cst_44 {dimension_numbers = #tpu.dot_dimension_numbers<[1], [0], [0], [1], [0, 0, 1, 1], [], []>} : vector<16x8xf32>, vector<8x32xf32>, vector<16x32xf32> -> vector<16x32xf32>
    %96 = arith.addf %73, %95 : vector<16x32xf32>
    %97 = vector.extract_strided_slice %26 {offsets = [0, 24], sizes = [16, 8], strides = [1, 1]} : vector<16x32xf32> to vector<16x8xf32>
    %98 = vector.extract_strided_slice %27 {offsets = [0, 24], sizes = [16, 8], strides = [1, 1]} : vector<16x32xf32> to vector<16x8xf32>
    %cst_45 = arith.constant dense<0.000000e+00> : vector<16x16xf32>
    %99 = tpu.matmul %97, %98, %cst_45 {dimension_numbers = #tpu.dot_dimension_numbers<[1], [1], [0], [0], [0, 0, 1, 0], [], []>} : vector<16x8xf32>, vector<16x8xf32>, vector<16x16xf32> -> vector<16x16xf32>
    %100 = arith.addf %99, %2 : vector<16x16xf32>
    %cst_46 = arith.constant dense<0xFF800000> : vector<16xf32>
    %101 = vector.multi_reduction <maximumf>, %100, %cst_46 [1] : vector<16x16xf32> to vector<16xf32>
    %102 = vector.shape_cast %101 : vector<16xf32> to vector<16x1xf32>
    %103 = vector.broadcast %102 : vector<16x1xf32> to vector<16x16xf32>
    %104 = arith.subf %100, %103 : vector<16x16xf32>
    %105 = math.exp %104 : vector<16x16xf32>
    %cst_47 = arith.constant dense<0.000000e+00> : vector<16xf32>
    %106 = vector.multi_reduction <add>, %105, %cst_47 [1] : vector<16x16xf32> to vector<16xf32>
    %107 = vector.shape_cast %106 : vector<16xf32> to vector<16x1xf32>
    %108 = tpu.reciprocal %107 {approx = true} : vector<16x1xf32> -> vector<16x1xf32>
    %109 = arith.mulf %107, %108 : vector<16x1xf32>
    %cst_48 = arith.constant 2.000000e+00 : f32
    %110 = vector.broadcast %cst_48 : f32 to vector<16x1xf32>
    %111 = arith.subf %110, %109 : vector<16x1xf32>
    %112 = arith.mulf %108, %111 : vector<16x1xf32>
    %113 = vector.broadcast %112 : vector<16x1xf32> to vector<16x16xf32>
    %114 = arith.mulf %105, %113 : vector<16x16xf32>
    %115 = vector.extract_strided_slice %28 {offsets = [0, 24], sizes = [16, 8], strides = [1, 1]} : vector<16x32xf32> to vector<16x8xf32>
    %cst_49 = arith.constant dense<0.000000e+00> : vector<16x8xf32>
    %116 = tpu.matmul %114, %115, %cst_49 {dimension_numbers = #tpu.dot_dimension_numbers<[1], [0], [0], [1], [0, 0, 1, 1], [], []>} : vector<16x16xf32>, vector<16x8xf32>, vector<16x8xf32> -> vector<16x8xf32>
    %117 = vector.extract_strided_slice %20 {offsets = [0, 96], sizes = [8, 32], strides = [1, 1]} : vector<8x128xf32> to vector<8x32xf32>
    %cst_50 = arith.constant dense<0.000000e+00> : vector<16x32xf32>
    %118 = tpu.matmul %116, %117, %cst_50 {dimension_numbers = #tpu.dot_dimension_numbers<[1], [0], [0], [1], [0, 0, 1, 1], [], []>} : vector<16x8xf32>, vector<8x32xf32>, vector<16x32xf32> -> vector<16x32xf32>
    %119 = arith.addf %96, %118 : vector<16x32xf32>
    %120 = vector.broadcast %9 : vector<1x32xf32> to vector<16x32xf32>
    %121 = arith.addf %119, %120 : vector<16x32xf32>
    %122 = arith.addf %121, %0 : vector<16x32xf32>
    %cst_51 = arith.constant dense<0.000000e+00> : vector<16xf32>
    %123 = vector.multi_reduction <add>, %122, %cst_51 [1] : vector<16x32xf32> to vector<16xf32>
    %124 = vector.shape_cast %123 : vector<16xf32> to vector<16x1xf32>
    %cst_52 = arith.constant 3.200000e+01 : f32
    %125 = vector.broadcast %cst_52 : f32 to vector<16x1xf32>
    %126 = arith.divf %124, %125 : vector<16x1xf32>
    %127 = vector.broadcast %126 : vector<16x1xf32> to vector<16x32xf32>
    %128 = arith.subf %122, %127 : vector<16x32xf32>
    %129 = arith.mulf %128, %128 : vector<16x32xf32>
    %cst_53 = arith.constant dense<0.000000e+00> : vector<16xf32>
    %130 = vector.multi_reduction <add>, %129, %cst_53 [1] : vector<16x32xf32> to vector<16xf32>
    %131 = vector.shape_cast %130 : vector<16xf32> to vector<16x1xf32>
    %cst_54 = arith.constant 3.200000e+01 : f32
    %132 = vector.broadcast %cst_54 : f32 to vector<16x1xf32>
    %133 = arith.divf %131, %132 : vector<16x1xf32>
    %cst_55 = arith.constant 9.99999974E-6 : f32
    %134 = vector.broadcast %cst_55 : f32 to vector<16x1xf32>
    %135 = arith.addf %133, %134 : vector<16x1xf32>
    %136 = math.rsqrt %135 : vector<16x1xf32>
    %137 = vector.broadcast %136 : vector<16x1xf32> to vector<16x32xf32>
    %138 = arith.mulf %128, %137 : vector<16x32xf32>
    %139 = vector.broadcast %14 : vector<1x32xf32> to vector<16x32xf32>
    %140 = arith.mulf %138, %139 : vector<16x32xf32>
    %141 = vector.broadcast %15 : vector<1x32xf32> to vector<16x32xf32>
    %142 = arith.addf %140, %141 : vector<16x32xf32>
    %143 = arith.truncf %142 : vector<16x32xf32> to vector<16x32xbf16>
    %144 = vector.extract_strided_slice %6 {offsets = [0, 0], sizes = [32, 32], strides = [1, 1]} : vector<32x96xbf16> to vector<32x32xbf16>
    %cst_56 = arith.constant dense<0.000000e+00> : vector<16x32xf32>
    %145 = tpu.matmul %143, %144, %cst_56 {dimension_numbers = #tpu.dot_dimension_numbers<[1], [0], [0], [1], [0, 0, 1, 1], [], []>} : vector<16x32xbf16>, vector<32x32xbf16>, vector<16x32xf32> -> vector<16x32xf32>
    %146 = vector.extract_strided_slice %10 {offsets = [0, 0], sizes = [1, 32], strides = [1, 1]} : vector<1x96xf32> to vector<1x32xf32>
    %147 = vector.broadcast %146 : vector<1x32xf32> to vector<16x32xf32>
    %148 = arith.addf %145, %147 : vector<16x32xf32>
    %149 = arith.truncf %1 : vector<16x32xf32> to vector<16x32xbf16>
    %150 = vector.extract_strided_slice %6 {offsets = [0, 32], sizes = [32, 64], strides = [1, 1]} : vector<32x96xbf16> to vector<32x64xbf16>
    %cst_57 = arith.constant dense<0.000000e+00> : vector<16x64xf32>
    %151 = tpu.matmul %149, %150, %cst_57 {dimension_numbers = #tpu.dot_dimension_numbers<[1], [0], [0], [1], [0, 0, 1, 1], [], []>} : vector<16x32xbf16>, vector<32x64xbf16>, vector<16x64xf32> -> vector<16x64xf32>
    %152 = vector.extract_strided_slice %10 {offsets = [0, 32], sizes = [1, 64], strides = [1, 1]} : vector<1x96xf32> to vector<1x64xf32>
    %153 = vector.broadcast %152 : vector<1x64xf32> to vector<16x64xf32>
    %154 = arith.addf %151, %153 : vector<16x64xf32>
    %155 = vector.extract_strided_slice %154 {offsets = [0, 0], sizes = [16, 32], strides = [1, 1]} : vector<16x64xf32> to vector<16x32xf32>
    %156 = vector.extract_strided_slice %154 {offsets = [0, 32], sizes = [16, 32], strides = [1, 1]} : vector<16x64xf32> to vector<16x32xf32>
    %157 = vector.extract_strided_slice %148 {offsets = [0, 0], sizes = [16, 8], strides = [1, 1]} : vector<16x32xf32> to vector<16x8xf32>
    %158 = vector.extract_strided_slice %155 {offsets = [0, 0], sizes = [16, 8], strides = [1, 1]} : vector<16x32xf32> to vector<16x8xf32>
    %cst_58 = arith.constant dense<0.000000e+00> : vector<16x16xf32>
    %159 = tpu.matmul %157, %158, %cst_58 {dimension_numbers = #tpu.dot_dimension_numbers<[1], [1], [0], [0], [0, 0, 1, 0], [], []>} : vector<16x8xf32>, vector<16x8xf32>, vector<16x16xf32> -> vector<16x16xf32>
    %160 = arith.addf %159, %3 : vector<16x16xf32>
    %cst_59 = arith.constant dense<0xFF800000> : vector<16xf32>
    %161 = vector.multi_reduction <maximumf>, %160, %cst_59 [1] : vector<16x16xf32> to vector<16xf32>
    %162 = vector.shape_cast %161 : vector<16xf32> to vector<16x1xf32>
    %163 = vector.broadcast %162 : vector<16x1xf32> to vector<16x16xf32>
    %164 = arith.subf %160, %163 : vector<16x16xf32>
    %165 = math.exp %164 : vector<16x16xf32>
    %cst_60 = arith.constant dense<0.000000e+00> : vector<16xf32>
    %166 = vector.multi_reduction <add>, %165, %cst_60 [1] : vector<16x16xf32> to vector<16xf32>
    %167 = vector.shape_cast %166 : vector<16xf32> to vector<16x1xf32>
    %168 = tpu.reciprocal %167 {approx = true} : vector<16x1xf32> -> vector<16x1xf32>
    %169 = arith.mulf %167, %168 : vector<16x1xf32>
    %cst_61 = arith.constant 2.000000e+00 : f32
    %170 = vector.broadcast %cst_61 : f32 to vector<16x1xf32>
    %171 = arith.subf %170, %169 : vector<16x1xf32>
    %172 = arith.mulf %168, %171 : vector<16x1xf32>
    %173 = vector.broadcast %172 : vector<16x1xf32> to vector<16x16xf32>
    %174 = arith.mulf %165, %173 : vector<16x16xf32>
    %175 = vector.extract_strided_slice %156 {offsets = [0, 0], sizes = [16, 8], strides = [1, 1]} : vector<16x32xf32> to vector<16x8xf32>
    %cst_62 = arith.constant dense<0.000000e+00> : vector<16x8xf32>
    %176 = tpu.matmul %174, %175, %cst_62 {dimension_numbers = #tpu.dot_dimension_numbers<[1], [0], [0], [1], [0, 0, 1, 1], [], []>} : vector<16x16xf32>, vector<16x8xf32>, vector<16x8xf32> -> vector<16x8xf32>
    %177 = vector.extract_strided_slice %21 {offsets = [0, 0], sizes = [8, 32], strides = [1, 1]} : vector<8x128xf32> to vector<8x32xf32>
    %cst_63 = arith.constant dense<0.000000e+00> : vector<16x32xf32>
    %178 = tpu.matmul %176, %177, %cst_63 {dimension_numbers = #tpu.dot_dimension_numbers<[1], [0], [0], [1], [0, 0, 1, 1], [], []>} : vector<16x8xf32>, vector<8x32xf32>, vector<16x32xf32> -> vector<16x32xf32>
    %179 = vector.extract_strided_slice %148 {offsets = [0, 8], sizes = [16, 8], strides = [1, 1]} : vector<16x32xf32> to vector<16x8xf32>
    %180 = vector.extract_strided_slice %155 {offsets = [0, 8], sizes = [16, 8], strides = [1, 1]} : vector<16x32xf32> to vector<16x8xf32>
    %cst_64 = arith.constant dense<0.000000e+00> : vector<16x16xf32>
    %181 = tpu.matmul %179, %180, %cst_64 {dimension_numbers = #tpu.dot_dimension_numbers<[1], [1], [0], [0], [0, 0, 1, 0], [], []>} : vector<16x8xf32>, vector<16x8xf32>, vector<16x16xf32> -> vector<16x16xf32>
    %182 = arith.addf %181, %3 : vector<16x16xf32>
    %cst_65 = arith.constant dense<0xFF800000> : vector<16xf32>
    %183 = vector.multi_reduction <maximumf>, %182, %cst_65 [1] : vector<16x16xf32> to vector<16xf32>
    %184 = vector.shape_cast %183 : vector<16xf32> to vector<16x1xf32>
    %185 = vector.broadcast %184 : vector<16x1xf32> to vector<16x16xf32>
    %186 = arith.subf %182, %185 : vector<16x16xf32>
    %187 = math.exp %186 : vector<16x16xf32>
    %cst_66 = arith.constant dense<0.000000e+00> : vector<16xf32>
    %188 = vector.multi_reduction <add>, %187, %cst_66 [1] : vector<16x16xf32> to vector<16xf32>
    %189 = vector.shape_cast %188 : vector<16xf32> to vector<16x1xf32>
    %190 = tpu.reciprocal %189 {approx = true} : vector<16x1xf32> -> vector<16x1xf32>
    %191 = arith.mulf %189, %190 : vector<16x1xf32>
    %cst_67 = arith.constant 2.000000e+00 : f32
    %192 = vector.broadcast %cst_67 : f32 to vector<16x1xf32>
    %193 = arith.subf %192, %191 : vector<16x1xf32>
    %194 = arith.mulf %190, %193 : vector<16x1xf32>
    %195 = vector.broadcast %194 : vector<16x1xf32> to vector<16x16xf32>
    %196 = arith.mulf %187, %195 : vector<16x16xf32>
    %197 = vector.extract_strided_slice %156 {offsets = [0, 8], sizes = [16, 8], strides = [1, 1]} : vector<16x32xf32> to vector<16x8xf32>
    %cst_68 = arith.constant dense<0.000000e+00> : vector<16x8xf32>
    %198 = tpu.matmul %196, %197, %cst_68 {dimension_numbers = #tpu.dot_dimension_numbers<[1], [0], [0], [1], [0, 0, 1, 1], [], []>} : vector<16x16xf32>, vector<16x8xf32>, vector<16x8xf32> -> vector<16x8xf32>
    %199 = vector.extract_strided_slice %21 {offsets = [0, 32], sizes = [8, 32], strides = [1, 1]} : vector<8x128xf32> to vector<8x32xf32>
    %cst_69 = arith.constant dense<0.000000e+00> : vector<16x32xf32>
    %200 = tpu.matmul %198, %199, %cst_69 {dimension_numbers = #tpu.dot_dimension_numbers<[1], [0], [0], [1], [0, 0, 1, 1], [], []>} : vector<16x8xf32>, vector<8x32xf32>, vector<16x32xf32> -> vector<16x32xf32>
    %201 = arith.addf %178, %200 : vector<16x32xf32>
    %202 = vector.extract_strided_slice %148 {offsets = [0, 16], sizes = [16, 8], strides = [1, 1]} : vector<16x32xf32> to vector<16x8xf32>
    %203 = vector.extract_strided_slice %155 {offsets = [0, 16], sizes = [16, 8], strides = [1, 1]} : vector<16x32xf32> to vector<16x8xf32>
    %cst_70 = arith.constant dense<0.000000e+00> : vector<16x16xf32>
    %204 = tpu.matmul %202, %203, %cst_70 {dimension_numbers = #tpu.dot_dimension_numbers<[1], [1], [0], [0], [0, 0, 1, 0], [], []>} : vector<16x8xf32>, vector<16x8xf32>, vector<16x16xf32> -> vector<16x16xf32>
    %205 = arith.addf %204, %3 : vector<16x16xf32>
    %cst_71 = arith.constant dense<0xFF800000> : vector<16xf32>
    %206 = vector.multi_reduction <maximumf>, %205, %cst_71 [1] : vector<16x16xf32> to vector<16xf32>
    %207 = vector.shape_cast %206 : vector<16xf32> to vector<16x1xf32>
    %208 = vector.broadcast %207 : vector<16x1xf32> to vector<16x16xf32>
    %209 = arith.subf %205, %208 : vector<16x16xf32>
    %210 = math.exp %209 : vector<16x16xf32>
    %cst_72 = arith.constant dense<0.000000e+00> : vector<16xf32>
    %211 = vector.multi_reduction <add>, %210, %cst_72 [1] : vector<16x16xf32> to vector<16xf32>
    %212 = vector.shape_cast %211 : vector<16xf32> to vector<16x1xf32>
    %213 = tpu.reciprocal %212 {approx = true} : vector<16x1xf32> -> vector<16x1xf32>
    %214 = arith.mulf %212, %213 : vector<16x1xf32>
    %cst_73 = arith.constant 2.000000e+00 : f32
    %215 = vector.broadcast %cst_73 : f32 to vector<16x1xf32>
    %216 = arith.subf %215, %214 : vector<16x1xf32>
    %217 = arith.mulf %213, %216 : vector<16x1xf32>
    %218 = vector.broadcast %217 : vector<16x1xf32> to vector<16x16xf32>
    %219 = arith.mulf %210, %218 : vector<16x16xf32>
    %220 = vector.extract_strided_slice %156 {offsets = [0, 16], sizes = [16, 8], strides = [1, 1]} : vector<16x32xf32> to vector<16x8xf32>
    %cst_74 = arith.constant dense<0.000000e+00> : vector<16x8xf32>
    %221 = tpu.matmul %219, %220, %cst_74 {dimension_numbers = #tpu.dot_dimension_numbers<[1], [0], [0], [1], [0, 0, 1, 1], [], []>} : vector<16x16xf32>, vector<16x8xf32>, vector<16x8xf32> -> vector<16x8xf32>
    %222 = vector.extract_strided_slice %21 {offsets = [0, 64], sizes = [8, 32], strides = [1, 1]} : vector<8x128xf32> to vector<8x32xf32>
    %cst_75 = arith.constant dense<0.000000e+00> : vector<16x32xf32>
    %223 = tpu.matmul %221, %222, %cst_75 {dimension_numbers = #tpu.dot_dimension_numbers<[1], [0], [0], [1], [0, 0, 1, 1], [], []>} : vector<16x8xf32>, vector<8x32xf32>, vector<16x32xf32> -> vector<16x32xf32>
    %224 = arith.addf %201, %223 : vector<16x32xf32>
    %225 = vector.extract_strided_slice %148 {offsets = [0, 24], sizes = [16, 8], strides = [1, 1]} : vector<16x32xf32> to vector<16x8xf32>
    %226 = vector.extract_strided_slice %155 {offsets = [0, 24], sizes = [16, 8], strides = [1, 1]} : vector<16x32xf32> to vector<16x8xf32>
    %cst_76 = arith.constant dense<0.000000e+00> : vector<16x16xf32>
    %227 = tpu.matmul %225, %226, %cst_76 {dimension_numbers = #tpu.dot_dimension_numbers<[1], [1], [0], [0], [0, 0, 1, 0], [], []>} : vector<16x8xf32>, vector<16x8xf32>, vector<16x16xf32> -> vector<16x16xf32>
    %228 = arith.addf %227, %3 : vector<16x16xf32>
    %cst_77 = arith.constant dense<0xFF800000> : vector<16xf32>
    %229 = vector.multi_reduction <maximumf>, %228, %cst_77 [1] : vector<16x16xf32> to vector<16xf32>
    %230 = vector.shape_cast %229 : vector<16xf32> to vector<16x1xf32>
    %231 = vector.broadcast %230 : vector<16x1xf32> to vector<16x16xf32>
    %232 = arith.subf %228, %231 : vector<16x16xf32>
    %233 = math.exp %232 : vector<16x16xf32>
    %cst_78 = arith.constant dense<0.000000e+00> : vector<16xf32>
    %234 = vector.multi_reduction <add>, %233, %cst_78 [1] : vector<16x16xf32> to vector<16xf32>
    %235 = vector.shape_cast %234 : vector<16xf32> to vector<16x1xf32>
    %236 = tpu.reciprocal %235 {approx = true} : vector<16x1xf32> -> vector<16x1xf32>
    %237 = arith.mulf %235, %236 : vector<16x1xf32>
    %cst_79 = arith.constant 2.000000e+00 : f32
    %238 = vector.broadcast %cst_79 : f32 to vector<16x1xf32>
    %239 = arith.subf %238, %237 : vector<16x1xf32>
    %240 = arith.mulf %236, %239 : vector<16x1xf32>
    %241 = vector.broadcast %240 : vector<16x1xf32> to vector<16x16xf32>
    %242 = arith.mulf %233, %241 : vector<16x16xf32>
    %243 = vector.extract_strided_slice %156 {offsets = [0, 24], sizes = [16, 8], strides = [1, 1]} : vector<16x32xf32> to vector<16x8xf32>
    %cst_80 = arith.constant dense<0.000000e+00> : vector<16x8xf32>
    %244 = tpu.matmul %242, %243, %cst_80 {dimension_numbers = #tpu.dot_dimension_numbers<[1], [0], [0], [1], [0, 0, 1, 1], [], []>} : vector<16x16xf32>, vector<16x8xf32>, vector<16x8xf32> -> vector<16x8xf32>
    %245 = vector.extract_strided_slice %21 {offsets = [0, 96], sizes = [8, 32], strides = [1, 1]} : vector<8x128xf32> to vector<8x32xf32>
    %cst_81 = arith.constant dense<0.000000e+00> : vector<16x32xf32>
    %246 = tpu.matmul %244, %245, %cst_81 {dimension_numbers = #tpu.dot_dimension_numbers<[1], [0], [0], [1], [0, 0, 1, 1], [], []>} : vector<16x8xf32>, vector<8x32xf32>, vector<16x32xf32> -> vector<16x32xf32>
    %247 = arith.addf %224, %246 : vector<16x32xf32>
    %248 = vector.broadcast %11 : vector<1x32xf32> to vector<16x32xf32>
    %249 = arith.addf %247, %248 : vector<16x32xf32>
    %250 = arith.addf %249, %142 : vector<16x32xf32>
    %cst_82 = arith.constant dense<0.000000e+00> : vector<16xf32>
    %251 = vector.multi_reduction <add>, %250, %cst_82 [1] : vector<16x32xf32> to vector<16xf32>
    %252 = vector.shape_cast %251 : vector<16xf32> to vector<16x1xf32>
    %cst_83 = arith.constant 3.200000e+01 : f32
    %253 = vector.broadcast %cst_83 : f32 to vector<16x1xf32>
    %254 = arith.divf %252, %253 : vector<16x1xf32>
    %255 = vector.broadcast %254 : vector<16x1xf32> to vector<16x32xf32>
    %256 = arith.subf %250, %255 : vector<16x32xf32>
    %257 = arith.mulf %256, %256 : vector<16x32xf32>
    %cst_84 = arith.constant dense<0.000000e+00> : vector<16xf32>
    %258 = vector.multi_reduction <add>, %257, %cst_84 [1] : vector<16x32xf32> to vector<16xf32>
    %259 = vector.shape_cast %258 : vector<16xf32> to vector<16x1xf32>
    %cst_85 = arith.constant 3.200000e+01 : f32
    %260 = vector.broadcast %cst_85 : f32 to vector<16x1xf32>
    %261 = arith.divf %259, %260 : vector<16x1xf32>
    %cst_86 = arith.constant 9.99999974E-6 : f32
    %262 = vector.broadcast %cst_86 : f32 to vector<16x1xf32>
    %263 = arith.addf %261, %262 : vector<16x1xf32>
    %264 = math.rsqrt %263 : vector<16x1xf32>
    %265 = vector.broadcast %264 : vector<16x1xf32> to vector<16x32xf32>
    %266 = arith.mulf %256, %265 : vector<16x32xf32>
    %267 = vector.broadcast %16 : vector<1x32xf32> to vector<16x32xf32>
    %268 = arith.mulf %266, %267 : vector<16x32xf32>
    %269 = vector.broadcast %17 : vector<1x32xf32> to vector<16x32xf32>
    %270 = arith.addf %268, %269 : vector<16x32xf32>
    %271 = arith.truncf %270 : vector<16x32xf32> to vector<16x32xbf16>
    %cst_87 = arith.constant dense<0.000000e+00> : vector<16x128xf32>
    %272 = tpu.matmul %271, %4, %cst_87 {dimension_numbers = #tpu.dot_dimension_numbers<[1], [0], [0], [1], [0, 0, 1, 1], [], []>} : vector<16x32xbf16>, vector<32x128xbf16>, vector<16x128xf32> -> vector<16x128xf32>
    %273 = vector.broadcast %12 : vector<1x128xf32> to vector<16x128xf32>
    %274 = arith.addf %272, %273 : vector<16x128xf32>
    %cst_88 = arith.constant 0.000000e+00 : f32
    %275 = vector.broadcast %cst_88 : f32 to vector<16x128xf32>
    %276 = arith.maximumf %274, %275 : vector<16x128xf32>
    %277 = arith.truncf %276 : vector<16x128xf32> to vector<16x128xbf16>
    %cst_89 = arith.constant dense<0.000000e+00> : vector<16x32xf32>
    %278 = tpu.matmul %277, %7, %cst_89 {dimension_numbers = #tpu.dot_dimension_numbers<[1], [0], [0], [1], [0, 0, 1, 1], [], []>} : vector<16x128xbf16>, vector<128x32xbf16>, vector<16x32xf32> -> vector<16x32xf32>
    %279 = vector.broadcast %13 : vector<1x32xf32> to vector<16x32xf32>
    %280 = arith.addf %278, %279 : vector<16x32xf32>
    %281 = arith.addf %280, %270 : vector<16x32xf32>
    %cst_90 = arith.constant dense<0.000000e+00> : vector<16xf32>
    %282 = vector.multi_reduction <add>, %281, %cst_90 [1] : vector<16x32xf32> to vector<16xf32>
    %283 = vector.shape_cast %282 : vector<16xf32> to vector<16x1xf32>
    %cst_91 = arith.constant 3.200000e+01 : f32
    %284 = vector.broadcast %cst_91 : f32 to vector<16x1xf32>
    %285 = arith.divf %283, %284 : vector<16x1xf32>
    %286 = vector.broadcast %285 : vector<16x1xf32> to vector<16x32xf32>
    %287 = arith.subf %281, %286 : vector<16x32xf32>
    %288 = arith.mulf %287, %287 : vector<16x32xf32>
    %cst_92 = arith.constant dense<0.000000e+00> : vector<16xf32>
    %289 = vector.multi_reduction <add>, %288, %cst_92 [1] : vector<16x32xf32> to vector<16xf32>
    %290 = vector.shape_cast %289 : vector<16xf32> to vector<16x1xf32>
    %cst_93 = arith.constant 3.200000e+01 : f32
    %291 = vector.broadcast %cst_93 : f32 to vector<16x1xf32>
    %292 = arith.divf %290, %291 : vector<16x1xf32>
    %cst_94 = arith.constant 9.99999974E-6 : f32
    %293 = vector.broadcast %cst_94 : f32 to vector<16x1xf32>
    %294 = arith.addf %292, %293 : vector<16x1xf32>
    %295 = math.rsqrt %294 : vector<16x1xf32>
    %296 = vector.broadcast %295 : vector<16x1xf32> to vector<16x32xf32>
    %297 = arith.mulf %287, %296 : vector<16x32xf32>
    %298 = vector.broadcast %18 : vector<1x32xf32> to vector<16x32xf32>
    %299 = arith.mulf %297, %298 : vector<16x32xf32>
    %300 = vector.broadcast %19 : vector<1x32xf32> to vector<16x32xf32>
    %301 = arith.addf %299, %300 : vector<16x32xf32>
    %cst_95 = arith.constant 0.000000e+00 : f32
    %302 = vector.broadcast %cst_95 : f32 to vector<16x96xf32>
    %303 = tpu.concatenate %301, %302 in 1 : vector<16x32xf32>, vector<16x96xf32> -> vector<16x128xf32>
    %c0_96 = arith.constant 0 : index
    %c0_97 = arith.constant 0 : index
    %304 = vector.load %arg7[%c0_96, %c0_97] : memref<16x128xf32, #tpu.memory_space<vmem>>, vector<16x128xf32>
    tpu.vector_store %arg7[%c0_96, %c0_97], %303 {strides = array<i32>} : memref<16x128xf32, #tpu.memory_space<vmem>>, vector<16x128xf32>,
    return
  }
  func.func @transform_0(%arg0: i32) -> (i32, i32) {
    %c0_i32 = arith.constant 0 : i32
    %c0_i32_0 = arith.constant 0 : i32
    %c0_i32_1 = arith.constant 0 : i32
    return %c0_i32, %c0_i32_0 : i32, i32
  }
  func.func @transform_1(%arg0: i32) -> (i32, i32) {
    %c0_i32 = arith.constant 0 : i32
    %c0_i32_0 = arith.constant 0 : i32
    %c0_i32_1 = arith.constant 0 : i32
    return %c0_i32, %c0_i32_0 : i32, i32
  }
  func.func @transform_2(%arg0: i32) -> (i32, i32) {
    %c0_i32 = arith.constant 0 : i32
    %c0_i32_0 = arith.constant 0 : i32
    %c0_i32_1 = arith.constant 0 : i32
    return %c0_i32, %c0_i32_0 : i32, i32
  }
  func.func @transform_3(%arg0: i32) -> (i32, i32) {
    %c0_i32 = arith.constant 0 : i32
    %c0_i32_0 = arith.constant 0 : i32
    %c0_i32_1 = arith.constant 0 : i32
    return %c0_i32, %c0_i32_0 : i32, i32
  }
  func.func @transform_4(%arg0: i32) -> (i32, i32) {
    %c0_i32 = arith.constant 0 : i32
    %c0_i32_0 = arith.constant 0 : i32
    %c0_i32_1 = arith.constant 0 : i32
    return %c0_i32, %c0_i32_0 : i32, i32
  }
  func.func @transform_5(%arg0: i32) -> (i32, i32) {
    %c0_i32 = arith.constant 0 : i32
    %c0_i32_0 = arith.constant 0 : i32
    %c0_i32_1 = arith.constant 0 : i32
    return %c0_i32, %c0_i32_0 : i32, i32
  }
  func.func @transform_6(%arg0: i32) -> (i32, i32) {
    %c0_i32 = arith.constant 0 : i32
    %c0_i32_0 = arith.constant 0 : i32
    %c0_i32_1 = arith.constant 0 : i32
    return %c0_i32, %c0_i32_0 : i32, i32
  }
}

</mosaic_0001>

<llo_original>
// kernel: fwd.1
$region0: #{fwd.1}
  #allocation0 [shape = 'u32[]', space=smem, size = 0x4, offset = 0x4, fixed_abs, tag = 'smem constant byte address 0x4 - core index']
  #allocation1 [shape = 'u32[72,128]{1,0:T(1,128)}', space=vmem, size = 0x9000, scoped, tag = 'internal scratch']
  %s0 = inlined_call_operand.hbm [shape: f32[16,32], index: 0, kind: input, shape index: {}]
  %s1 = inlined_call_operand.hbm [shape: f32[16,32], index: 1, kind: input, shape index: {}]
  %s2 = inlined_call_operand.hbm [shape: f32[16,16], index: 2, kind: input, shape index: {}]
  %s3 = inlined_call_operand.hbm [shape: f32[16,16], index: 3, kind: input, shape index: {}]
  %s4 = inlined_call_operand.hbm [shape: bf16[224,128], index: 4, kind: input, shape index: {}]
  %s5 = inlined_call_operand.hbm [shape: f32[32,128], index: 5, kind: input, shape index: {}]
  %s6 = inlined_call_operand.vmem [shape: f32[16,128], index: 6, kind: output, shape index: {}]
  %s7 = sld [smem:[#allocation0]]
  $region58: #{fwd.1} parent=0
    _
  %s9 = ssub.s32 1, %s7
  %s10 = scalar_select 0, %s9, %s7
  $region1: #{fwd.1} parent=0
    #allocation2 [shape = 'u8[8192]{0}', space=vmem, size = 0x2000, scoped, tag = 'input window, operand 0, single buffered']
    #allocation3 [shape = 's32[1]{0}', space=sflag, size = 0x4, scoped, tag = 'scoped memory for fwd.1']
    #allocation4 [shape = 'u8[8192]{0}', space=vmem, size = 0x2000, scoped, tag = 'input window, operand 1, single buffered']
    #allocation5 [shape = 's32[1]{0}', space=sflag, size = 0x4, scoped, tag = 'scoped memory for fwd.1']
    #allocation6 [shape = 'u8[8192]{0}', space=vmem, size = 0x2000, scoped, tag = 'input window, operand 2, single buffered']
    #allocation7 [shape = 'u8[8192]{0}', space=vmem, size = 0x2000, scoped, tag = 'input window, operand 3, single buffered']
    #allocation8 [shape = 's32[1]{0}', space=sflag, size = 0x4, scoped, tag = 'scoped memory for fwd.1']
    #allocation9 [shape = 'u8[57344]{0}', space=vmem, size = 0xe000, scoped, tag = 'input window, operand 4, single buffered']
    #allocation10 [shape = 'u8[16384]{0}', space=vmem, size = 0x4000, scoped, tag = 'input window, operand 5, single buffered']
    #allocation11 [shape = 's32[1]{0}', space=sflag, size = 0x4, scoped, tag = 'scoped memory for fwd.1']
    %11 = vsyncpa [#allocation3], 0
    %12 = vsyncpa [#allocation5], 0
    %13 = vsyncpa [#allocation8], 0
    %14 = vsyncpa [#allocation11], 0
    // Predicated region
    $region2: #{fwd.1} parent=1 // pred_check
      _
    $region3: #{fwd.1} parent=1 // pred_check_branch
      %16 = sbr.rel (0) target = $region5
    $region4: #{fwd.1} parent=1 // pred_region
      %18 = vsyncadd [#allocation3], 0
      %s19 = sshll.u32 %s0, 4
      %s20 = int_to_ptr.hbm [resolvable:$true] %s19
      %s21 = sshll.u32 [#allocation2], 4
      %s22 = int_to_ptr.vmem [resolvable:$true] %s21
      %27 = dma.hbm_to_vmem [thread:$0]  %s20, 256, %s22, [#allocation3], 128, 128, 8
    $region5: #{fwd.1} parent=1 // pred_fallthru
      _
    // Predicated region
    $region6: #{fwd.1} parent=1 // pred_check
      _
    $region7: #{fwd.1} parent=1 // pred_check_branch
      %29 = sbr.rel (0) target = $region9
    $region8: #{fwd.1} parent=1 // pred_region
      %31 = vsyncadd [#allocation5], 0
      %s32 = sshll.u32 %s1, 4
      %s33 = int_to_ptr.hbm [resolvable:$true] %s32
      %s34 = sshll.u32 [#allocation4], 4
      %s35 = int_to_ptr.vmem [resolvable:$true] %s34
      %40 = dma.hbm_to_vmem [thread:$0]  %s33, 256, %s35, [#allocation5], 128, 128, 8
    $region9: #{fwd.1} parent=1 // pred_fallthru
      _
    // Predicated region
    $region10: #{fwd.1} parent=1 // pred_check
      _
    $region11: #{fwd.1} parent=1 // pred_check_branch
      %42 = sbr.rel (0) target = $region13
    $region12: #{fwd.1} parent=1 // pred_region
      %44 = vsyncadd [#allocation5], 0
      %s45 = sshll.u32 %s2, 4
      %s46 = int_to_ptr.hbm [resolvable:$true] %s45
      %s47 = sshll.u32 [#allocation6], 4
      %s48 = int_to_ptr.vmem [resolvable:$true] %s47
      %53 = dma.hbm_to_vmem [thread:$0]  %s46, 256, %s48, [#allocation5], 128, 128, 8
    $region13: #{fwd.1} parent=1 // pred_fallthru
      _
    // Predicated region
    $region14: #{fwd.1} parent=1 // pred_check
      _
    $region15: #{fwd.1} parent=1 // pred_check_branch
      %55 = sbr.rel (0) target = $region17
    $region16: #{fwd.1} parent=1 // pred_region
      %57 = vsyncadd [#allocation8], 0
      %s58 = sshll.u32 %s3, 4
      %s59 = int_to_ptr.hbm [resolvable:$true] %s58
      %s60 = sshll.u32 [#allocation7], 4
      %s61 = int_to_ptr.vmem [resolvable:$true] %s60
      %66 = dma.hbm_to_vmem [thread:$0]  %s59, 256, %s61, [#allocation8], 128, 128, 8
    $region17: #{fwd.1} parent=1 // pred_fallthru
      _
    // Predicated region
    $region18: #{fwd.1} parent=1 // pred_check
      _
    $region19: #{fwd.1} parent=1 // pred_check_branch
      %68 = sbr.rel (0) target = $region21
    $region20: #{fwd.1} parent=1 // pred_region
      %70 = vsyncadd [#allocation8], 0
      %s71 = sshll.u32 %s4, 4
      %s72 = int_to_ptr.hbm [resolvable:$true] %s71
      %s73 = sshll.u32 [#allocation9], 4
      %s74 = int_to_ptr.vmem [resolvable:$true] %s73
      %79 = dma.hbm_to_vmem [thread:$0]  %s72, 1792, %s74, [#allocation8], 64, 64, 4
    $region21: #{fwd.1} parent=1 // pred_fallthru
      _
    // Predicated region
    $region22: #{fwd.1} parent=1 // pred_check
      _
    $region23: #{fwd.1} parent=1 // pred_check_branch
      %81 = sbr.rel (0) target = $region25
    $region24: #{fwd.1} parent=1 // pred_region
      %83 = vsyncadd [#allocation11], 0
      %s84 = sshll.u32 %s5, 4
      %s85 = int_to_ptr.hbm [resolvable:$true] %s84
      %s86 = sshll.u32 [#allocation10], 4
      %s87 = int_to_ptr.vmem [resolvable:$true] %s86
      %92 = dma.hbm_to_vmem [thread:$0]  %s85, 512, %s87, [#allocation11], 128, 128, 8
    $region25: #{fwd.1} parent=1 // pred_fallthru
      _
    // Predicated region
    $region26: #{fwd.1} parent=1 // pred_check
      _
    $region27: #{fwd.1} parent=1 // pred_check_branch
      %94 = sbr.rel (0) target = $region29
    $region28: #{fwd.1} parent=1 // pred_region
      %96 = dma.done [#allocation3], 256
    $region29: #{fwd.1} parent=1 // pred_fallthru
      _
    // Predicated region
    $region30: #{fwd.1} parent=1 // pred_check
      _
    $region31: #{fwd.1} parent=1 // pred_check_branch
      %98 = sbr.rel (0) target = $region33
    $region32: #{fwd.1} parent=1 // pred_region
      %100 = dma.done [#allocation5], 256
    $region33: #{fwd.1} parent=1 // pred_fallthru
      _
    // Predicated region
    $region34: #{fwd.1} parent=1 // pred_check
      _
    $region35: #{fwd.1} parent=1 // pred_check_branch
      %102 = sbr.rel (0) target = $region37
    $region36: #{fwd.1} parent=1 // pred_region
      %104 = dma.done [#allocation5], 256
    $region37: #{fwd.1} parent=1 // pred_fallthru
      _
    // Predicated region
    $region38: #{fwd.1} parent=1 // pred_check
      _
    $region39: #{fwd.1} parent=1 // pred_check_branch
      %106 = sbr.rel (0) target = $region41
    $region40: #{fwd.1} parent=1 // pred_region
      %108 = dma.done [#allocation8], 256
    $region41: #{fwd.1} parent=1 // pred_fallthru
      _
    // Predicated region
    $region42: #{fwd.1} parent=1 // pred_check
      _
    $region43: #{fwd.1} parent=1 // pred_check_branch
      %110 = sbr.rel (0) target = $region45
    $region44: #{fwd.1} parent=1 // pred_region
      %112 = dma.done [#allocation8], 1792
    $region45: #{fwd.1} parent=1 // pred_fallthru
      _
    // Predicated region
    $region46: #{fwd.1} parent=1 // pred_check
      _
    $region47: #{fwd.1} parent=1 // pred_check_branch
      %114 = sbr.rel (0) target = $region49
    $region48: #{fwd.1} parent=1 // pred_region
      %116 = dma.done [#allocation11], 512
    $region49: #{fwd.1} parent=1 // pred_fallthru
      _
    %v118 = vld [vmem:[#allocation2] sm:$0xff]
    %v119 = vld [vmem:[#allocation2 + $0x8] sm:$0xff]
    %v120 = vld [vmem:[#allocation4] sm:$0xff]
    %v121 = vld [vmem:[#allocation4 + $0x8] sm:$0xff]
    %v122 = vld [vmem:[#allocation6] sm:$0xff]
    %v123 = vld [vmem:[#allocation6 + $0x8] sm:$0xff]
    %v124 = vld [vmem:[#allocation7] sm:$0xff]
    %v125 = vld [vmem:[#allocation7 + $0x8] sm:$0xff]
    %v126 = vld [vmem:[#allocation9] sm:$0xf]
    %v127 = vld [vmem:[#allocation9 + $0x4] sm:$0xf]
    %v128 = vld [vmem:[#allocation9 + $0x8] sm:$0xf]
    %v129 = vld [vmem:[#allocation9 + $0xc] sm:$0xf]
    %v130 = vld [vmem:[#allocation9 + $0x10] sm:$0xf]
    %v131 = vld [vmem:[#allocation9 + $0x14] sm:$0xf]
    %v132 = vld [vmem:[#allocation9 + $0x18] sm:$0xf]
    %v133 = vld [vmem:[#allocation9 + $0x1c] sm:$0xf]
    %v134 = vld [vmem:[#allocation9 + $0x20] sm:$0xf]
    %v135 = vld [vmem:[#allocation9 + $0x24] sm:$0xf]
    %v136 = vld [vmem:[#allocation9 + $0x28] sm:$0xf]
    %v137 = vld [vmem:[#allocation9 + $0x2c] sm:$0xf]
    %v138 = vld [vmem:[#allocation9 + $0x30] sm:$0xf]
    %v139 = vld [vmem:[#allocation9 + $0x34] sm:$0xf]
    %v140 = vld [vmem:[#allocation9 + $0x38] sm:$0xf]
    %v141 = vld [vmem:[#allocation9 + $0x3c] sm:$0xf]
    %v142 = vld [vmem:[#allocation9 + $0x40] sm:$0xf]
    %v143 = vld [vmem:[#allocation9 + $0x44] sm:$0xf]
    %v144 = vld [vmem:[#allocation9 + $0x48] sm:$0xf]
    %v145 = vld [vmem:[#allocation9 + $0x4c] sm:$0xf]
    %v146 = vld [vmem:[#allocation9 + $0x50] sm:$0xf]
    %v147 = vld [vmem:[#allocation9 + $0x54] sm:$0xf]
    %v148 = vld [vmem:[#allocation9 + $0x58] sm:$0xf]
    %v149 = vld [vmem:[#allocation9 + $0x5c] sm:$0xf]
    %v150 = vld [vmem:[#allocation9 + $0x60] sm:$0xf]
    %v151 = vld [vmem:[#allocation9 + $0x64] sm:$0xf]
    %v152 = vld [vmem:[#allocation9 + $0x68] sm:$0xf]
    %v153 = vld [vmem:[#allocation9 + $0x6c] sm:$0xf]
    %v154 = vld [vmem:[#allocation10] sm:$0x1]
    %v155 = vld [vmem:[#allocation10 + $0x1] sm:$0x1]
    %v156 = vld [vmem:[#allocation10 + $0x2] sm:$0x1]
    %v157 = vld [vmem:[#allocation10 + $0x3] sm:$0x1]
    %v158 = vld [vmem:[#allocation10 + $0x4] sm:$0x1]
    %v159 = vld [vmem:[#allocation10 + $0x5] sm:$0x1]
    %v160 = vld [vmem:[#allocation10 + $0x6] sm:$0x1]
    %v161 = vld [vmem:[#allocation10 + $0x7] sm:$0x1]
    %v162 = vld [vmem:[#allocation10 + $0x8] sm:$0x1]
    %v163 = vld [vmem:[#allocation10 + $0x9] sm:$0x1]
    %v164 = vld [vmem:[#allocation10 + $0xa] sm:$0x1]
    %v165 = vld [vmem:[#allocation10 + $0xb] sm:$0x1]
    %v166 = vld [vmem:[#allocation10 + $0x10] sm:$0xff]
    %v167 = vld [vmem:[#allocation10 + $0x18] sm:$0xff]
    %v168 = vpack.c.bf16 %v119, %v118
    %v169 = vperm.slane %v154, 0
    %v174 = vunpack.c.l.b16 %v130
    %v175 = vunpack.c.l.b16 %v131
    %v176 = vunpack.c.l.b16 %v132
    %v177 = vunpack.c.l.b16 %v133
    %v178 = vpack.c.b16 %v175, %v174
    %v179 = vpack.c.b16 %v177, %v176
    %vm182 = vcmask 261120
    %v184 = vsel %vm182, %v168, 0
    %186 = vmatpush.bf16.msra.mxu0 0
    %187 = vmatpush.bf16.msra.mxu0 0
    %188 = vmatpush.bf16.msra.mxu0 0
    %189 = vmatpush.bf16.msra.mxu0 0
    %190 = vmatpush.bf16.msra.mxu0 0
    %191 = vmatpush.bf16.msra.mxu0 0
    %192 = vmatpush.bf16.msra.mxu0 %v179
    %193 = vmatpush.bf16.msra.mxu0 %v178
    %194 = vmatmul.bf16.gmra.mxu0 %v184
    %v195 = vpop.f32.mrf.mxu0
    %v196 = vadd.f32 %v169, %v195
    %v197 = vpop.f32.mrf.mxu0
    %v198 = vadd.f32 %v169, %v197
    %199 = vdwg.mxu0
    %202 = vrot.lane.b32.xlu0 %v196, 96
    %v203 = vpop.permute.xlu0 %202
    %204 = vrot.lane.b32.xlu0 %v198, 96
    %v205 = vpop.permute.xlu0 %204
    %vm206 = vcmask 64512
    %v207 = vsel %vm206, %v196, 0
    %v209 = vsel %vm206, %v198, 0
    %v211 = vsel %vm206, %v203, 0
    %v213 = vsel %vm206, %v205, 0
    %215 = vmatpush.xpose.msra.mxu0 0.0
    %216 = vmatpush.xpose.msra.mxu0 0.0
    %217 = vmatpush.xpose.msra.mxu0 0.0
    %218 = vmatpush.xpose.msra.mxu0 0.0
    %219 = vmatpush.xpose.msra.mxu0 0.0
    %220 = vmatpush.xpose.msra.mxu0 0.0
    %221 = vmatpush.xpose.msra.mxu0 0.0
    %222 = vmatpush.xpose.msra.mxu0 0.0
    %223 = vmatpush.xpose.msra.mxu0 0.0
    %224 = vmatpush.xpose.msra.mxu0 0.0
    %225 = vmatpush.xpose.msra.mxu0 0.0
    %226 = vmatpush.xpose.msra.mxu0 0.0
    %227 = vmatpush.xpose.msra.mxu0 0.0
    %228 = vmatpush.xpose.msra.mxu0 0.0
    %229 = vmatpush.xpose.msra.mxu0 %v213
    %230 = vmatpush.xpose.msra.mxu0 %v211
    %231 = vmatmul.f32.gmra.mxu0 %v207
    %v232 = vpop.f32.mrf.mxu0
    %v233 = vadd.f32 %v122, %v232
    %234 = vmatmul.f32.gmra.mxu0 %v209
    %v235 = vpop.f32.mrf.mxu0
    %v236 = vadd.f32 %v123, %v235
    %237 = vdwg.mxu0
    %vm238 = vcmask 130048
    %v239 = vsel %vm238, %v233, -inf
    %240 = vmax.xlane.f32.xlu0 %v239
    %v241 = vpop.xlane.xlu0 %240
    %v242 = vsel %vm238, %v236, -inf
    %243 = vmax.xlane.f32.xlu0 %v242
    %v244 = vpop.xlane.xlu0 %243
    %v245 = vsub.f32 %v233, %v241
    %v246 = vsub.f32 %v236, %v244
    %v247 = vmul.f32 %v245, 1.442695
    %v248 = vpow.pop %v247
    %v249 = vmul.f32 %v246, 1.442695
    %v250 = vpow.pop %v249
    %v251 = vsel %vm238, %v248, 0.0
    %252 = vadd.xlane.f32.xlu0 %v251
    %v253 = vpop.xlane.xlu0 %252
    %v254 = vsel %vm238, %v250, 0.0
    %255 = vadd.xlane.f32.xlu0 %v254
    %v256 = vpop.xlane.xlu0 %255
    %v257 = vrcp.pop %v253
    %v258 = vrcp.pop %v256
    %v259 = vmul.f32 %v253, %v257
    %v260 = vmul.f32 %v256, %v258
    %v261 = vsub.f32 2.0, %v259
    %v262 = vsub.f32 2.0, %v260
    %v263 = vmul.f32 %v257, %v261
    %v264 = vmul.f32 %v258, %v262
    %v265 = vmul.f32 %v248, %v263
    %v266 = vmul.f32 %v250, %v264
    %267 = vrot.lane.b32.xlu0 %v196, 64
    %v268 = vpop.permute.xlu0 %267
    %269 = vrot.lane.b32.xlu0 %v198, 64
    %v270 = vpop.permute.xlu0 %269
    %v274 = vsel %vm238, %v265, 0
    %v277 = vsel %vm238, %v266, 0
    %279 = vmatpush.msra.mxu0 0.0
    %280 = vmatpush.msra.mxu0 0.0
    %281 = vmatpush.msra.mxu0 0.0
    %282 = vmatpush.msra.mxu0 0.0
    %283 = vmatpush.msra.mxu0 0.0
    %284 = vmatpush.msra.mxu0 0.0
    %285 = vmatpush.msra.mxu0 0.0
    %286 = vmatpush.msra.mxu0 0.0
    %287 = vmatpush.msra.mxu0 0.0
    %288 = vmatpush.msra.mxu0 0.0
    %289 = vmatpush.msra.mxu0 0.0
    %290 = vmatpush.msra.mxu0 0.0
    %291 = vmatpush.msra.mxu0 0.0
    %292 = vmatpush.msra.mxu0 0.0
    %293 = vmatpush.msra.mxu0 %v270
    %294 = vmatpush.msra.mxu0 %v268
    %295 = vmatmul.f32.gmra.mxu0 %v274
    %v296 = vpop.f32.mrf.mxu0
    %v297 = vadd.f32 0.0, %v296
    %298 = vmatmul.f32.gmra.mxu0 %v277
    %v299 = vpop.f32.mrf.mxu0
    %v300 = vadd.f32 0.0, %v299
    %301 = vdwg.mxu0
    %302 = vrot.lane.b32.xlu0 %v196, 120
    %v303 = vpop.permute.xlu0 %302
    %304 = vrot.lane.b32.xlu0 %v198, 120
    %v305 = vpop.permute.xlu0 %304
    %306 = vrot.lane.b32.xlu0 %v196, 88
    %v307 = vpop.permute.xlu0 %306
    %308 = vrot.lane.b32.xlu0 %v198, 88
    %v309 = vpop.permute.xlu0 %308
    %v310 = vsel %vm206, %v303, 0
    %v312 = vsel %vm206, %v305, 0
    %v314 = vsel %vm206, %v307, 0
    %v316 = vsel %vm206, %v309, 0
    %318 = vmatpush.xpose.msra.mxu0 0.0
    %319 = vmatpush.xpose.msra.mxu0 0.0
    %320 = vmatpush.xpose.msra.mxu0 0.0
    %321 = vmatpush.xpose.msra.mxu0 0.0
    %322 = vmatpush.xpose.msra.mxu0 0.0
    %323 = vmatpush.xpose.msra.mxu0 0.0
    %324 = vmatpush.xpose.msra.mxu0 0.0
    %325 = vmatpush.xpose.msra.mxu0 0.0
    %326 = vmatpush.xpose.msra.mxu0 0.0
    %327 = vmatpush.xpose.msra.mxu0 0.0
    %328 = vmatpush.xpose.msra.mxu0 0.0
    %329 = vmatpush.xpose.msra.mxu0 0.0
    %330 = vmatpush.xpose.msra.mxu0 0.0
    %331 = vmatpush.xpose.msra.mxu0 0.0
    %332 = vmatpush.xpose.msra.mxu0 %v316
    %333 = vmatpush.xpose.msra.mxu0 %v314
    %334 = vmatmul.f32.gmra.mxu0 %v310
    %v335 = vpop.f32.mrf.mxu0
    %v336 = vadd.f32 %v122, %v335
    %337 = vmatmul.f32.gmra.mxu0 %v312
    %v338 = vpop.f32.mrf.mxu0
    %v339 = vadd.f32 %v123, %v338
    %340 = vdwg.mxu0
    %v341 = vsel %vm238, %v336, -inf
    %342 = vmax.xlane.f32.xlu0 %v341
    %v343 = vpop.xlane.xlu0 %342
    %v344 = vsel %vm238, %v339, -inf
    %345 = vmax.xlane.f32.xlu0 %v344
    %v346 = vpop.xlane.xlu0 %345
    %v347 = vsub.f32 %v336, %v343
    %v348 = vsub.f32 %v339, %v346
    %v349 = vmul.f32 %v347, 1.442695
    %v350 = vpow.pop %v349
    %v351 = vmul.f32 %v348, 1.442695
    %v352 = vpow.pop %v351
    %v353 = vsel %vm238, %v350, 0.0
    %354 = vadd.xlane.f32.xlu0 %v353
    %v355 = vpop.xlane.xlu0 %354
    %v356 = vsel %vm238, %v352, 0.0
    %357 = vadd.xlane.f32.xlu0 %v356
    %v358 = vpop.xlane.xlu0 %357
    %v359 = vrcp.pop %v355
    %v360 = vrcp.pop %v358
    %v361 = vmul.f32 %v355, %v359
    %v362 = vmul.f32 %v358, %v360
    %v363 = vsub.f32 2.0, %v361
    %v364 = vsub.f32 2.0, %v362
    %v365 = vmul.f32 %v359, %v363
    %v366 = vmul.f32 %v360, %v364
    %v367 = vmul.f32 %v350, %v365
    %v368 = vmul.f32 %v352, %v366
    %369 = vrot.lane.b32.xlu0 %v196, 56
    %v370 = vpop.permute.xlu0 %369
    %371 = vrot.lane.b32.xlu0 %v198, 56
    %v372 = vpop.permute.xlu0 %371
    %v376 = vsel %vm238, %v367, 0
    %v379 = vsel %vm238, %v368, 0
    %381 = vmatpush.msra.mxu0 0.0
    %382 = vmatpush.msra.mxu0 0.0
    %383 = vmatpush.msra.mxu0 0.0
    %384 = vmatpush.msra.mxu0 0.0
    %385 = vmatpush.msra.mxu0 0.0
    %386 = vmatpush.msra.mxu0 0.0
    %387 = vmatpush.msra.mxu0 0.0
    %388 = vmatpush.msra.mxu0 0.0
    %389 = vmatpush.msra.mxu0 0.0
    %390 = vmatpush.msra.mxu0 0.0
    %391 = vmatpush.msra.mxu0 0.0
    %392 = vmatpush.msra.mxu0 0.0
    %393 = vmatpush.msra.mxu0 0.0
    %394 = vmatpush.msra.mxu0 0.0
    %395 = vmatpush.msra.mxu0 %v372
    %396 = vmatpush.msra.mxu0 %v370
    %397 = vmatmul.f32.gmra.mxu0 %v376
    %v398 = vpop.f32.mrf.mxu0
    %v399 = vadd.f32 0.0, %v398
    %400 = vmatmul.f32.gmra.mxu0 %v379
    %v401 = vpop.f32.mrf.mxu0
    %v402 = vadd.f32 0.0, %v401
    %403 = vdwg.mxu0
    %405 = vrot.lane.b32.xlu0 %v166, 96
    %v406 = vpop.permute.xlu0 %405
    %v409 = vsel %vm206, %v399, 0
    %v412 = vsel %vm206, %v402, 0
    %414 = vmatpush.msra.mxu0 0.0
    %415 = vmatpush.msra.mxu0 0.0
    %416 = vmatpush.msra.mxu0 0.0
    %417 = vmatpush.msra.mxu0 0.0
    %418 = vmatpush.msra.mxu0 0.0
    %419 = vmatpush.msra.mxu0 0.0
    %420 = vmatpush.msra.mxu0 0.0
    %421 = vmatpush.msra.mxu0 0.0
    %422 = vmatpush.msra.mxu0 0.0
    %423 = vmatpush.msra.mxu0 0.0
    %424 = vmatpush.msra.mxu0 0.0
    %425 = vmatpush.msra.mxu0 0.0
    %426 = vmatpush.msra.mxu0 0.0
    %427 = vmatpush.msra.mxu0 0.0
    %428 = vmatpush.msra.mxu0 0.0
    %429 = vmatpush.msra.mxu0 %v406
    %430 = vmatmul.f32.gmra.mxu0 %v409
    %v431 = vpop.f32.mrf.mxu0
    %v432 = vadd.f32 0.0, %v431
    %433 = vmatmul.f32.gmra.mxu0 %v412
    %v434 = vpop.f32.mrf.mxu0
    %v435 = vadd.f32 0.0, %v434
    %436 = vdwg.mxu0
    %v438 = vsel %vm206, %v297, 0
    %v441 = vsel %vm206, %v300, 0
    %443 = vmatpush.msra.mxu0 0.0
    %444 = vmatpush.msra.mxu0 0.0
    %445 = vmatpush.msra.mxu0 0.0
    %446 = vmatpush.msra.mxu0 0.0
    %447 = vmatpush.msra.mxu0 0.0
    %448 = vmatpush.msra.mxu0 0.0
    %449 = vmatpush.msra.mxu0 0.0
    %450 = vmatpush.msra.mxu0 0.0
    %451 = vmatpush.msra.mxu0 0.0
    %452 = vmatpush.msra.mxu0 0.0
    %453 = vmatpush.msra.mxu0 0.0
    %454 = vmatpush.msra.mxu0 0.0
    %455 = vmatpush.msra.mxu0 0.0
    %456 = vmatpush.msra.mxu0 0.0
    %457 = vmatpush.msra.mxu0 0.0
    %458 = vmatpush.msra.mxu0 %v166
    %459 = vmatmul.f32.gmra.mxu0 %v438
    %v460 = vpop.f32.mrf.mxu0
    %v461 = vadd.f32 %v432, %v460
    %462 = vmatmul.f32.gmra.mxu0 %v441
    %v463 = vpop.f32.mrf.mxu0
    %v464 = vadd.f32 %v435, %v463
    %465 = vdwg.mxu0
    %466 = vrot.lane.b32.xlu0 %v196, 112
    %v467 = vpop.permute.xlu0 %466
    %468 = vrot.lane.b32.xlu0 %v198, 112
    %v469 = vpop.permute.xlu0 %468
    %470 = vrot.lane.b32.xlu0 %v196, 80
    %v471 = vpop.permute.xlu0 %470
    %472 = vrot.lane.b32.xlu0 %v198, 80
    %v473 = vpop.permute.xlu0 %472
    %v474 = vsel %vm206, %v467, 0
    %v476 = vsel %vm206, %v469, 0
    %v478 = vsel %vm206, %v471, 0
    %v480 = vsel %vm206, %v473, 0
    %482 = vmatpush.xpose.msra.mxu0 0.0
    %483 = vmatpush.xpose.msra.mxu0 0.0
    %484 = vmatpush.xpose.msra.mxu0 0.0
    %485 = vmatpush.xpose.msra.mxu0 0.0
    %486 = vmatpush.xpose.msra.mxu0 0.0
    %487 = vmatpush.xpose.msra.mxu0 0.0
    %488 = vmatpush.xpose.msra.mxu0 0.0
    %489 = vmatpush.xpose.msra.mxu0 0.0
    %490 = vmatpush.xpose.msra.mxu0 0.0
    %491 = vmatpush.xpose.msra.mxu0 0.0
    %492 = vmatpush.xpose.msra.mxu0 0.0
    %493 = vmatpush.xpose.msra.mxu0 0.0
    %494 = vmatpush.xpose.msra.mxu0 0.0
    %495 = vmatpush.xpose.msra.mxu0 0.0
    %496 = vmatpush.xpose.msra.mxu0 %v480
    %497 = vmatpush.xpose.msra.mxu0 %v478
    %498 = vmatmul.f32.gmra.mxu0 %v474
    %v499 = vpop.f32.mrf.mxu0
    %v500 = vadd.f32 %v122, %v499
    %501 = vmatmul.f32.gmra.mxu0 %v476
    %v502 = vpop.f32.mrf.mxu0
    %v503 = vadd.f32 %v123, %v502
    %504 = vdwg.mxu0
    %v505 = vsel %vm238, %v500, -inf
    %506 = vmax.xlane.f32.xlu0 %v505
    %v507 = vpop.xlane.xlu0 %506
    %v508 = vsel %vm238, %v503, -inf
    %509 = vmax.xlane.f32.xlu0 %v508
    %v510 = vpop.xlane.xlu0 %509
    %v511 = vsub.f32 %v500, %v507
    %v512 = vsub.f32 %v503, %v510
    %v513 = vmul.f32 %v511, 1.442695
    %v514 = vpow.pop %v513
    %v515 = vmul.f32 %v512, 1.442695
    %v516 = vpow.pop %v515
    %v517 = vsel %vm238, %v514, 0.0
    %518 = vadd.xlane.f32.xlu0 %v517
    %v519 = vpop.xlane.xlu0 %518
    %v520 = vsel %vm238, %v516, 0.0
    %521 = vadd.xlane.f32.xlu0 %v520
    %v522 = vpop.xlane.xlu0 %521
    %v523 = vrcp.pop %v519
    %v524 = vrcp.pop %v522
    %v525 = vmul.f32 %v519, %v523
    %v526 = vmul.f32 %v522, %v524
    %v527 = vsub.f32 2.0, %v525
    %v528 = vsub.f32 2.0, %v526
    %v529 = vmul.f32 %v523, %v527
    %v530 = vmul.f32 %v524, %v528
    %v531 = vmul.f32 %v514, %v529
    %v532 = vmul.f32 %v516, %v530
    %533 = vrot.lane.b32.xlu0 %v196, 48
    %v534 = vpop.permute.xlu0 %533
    %535 = vrot.lane.b32.xlu0 %v198, 48
    %v536 = vpop.permute.xlu0 %535
    %v540 = vsel %vm238, %v531, 0
    %v543 = vsel %vm238, %v532, 0
    %545 = vmatpush.msra.mxu0 0.0
    %546 = vmatpush.msra.mxu0 0.0
    %547 = vmatpush.msra.mxu0 0.0
    %548 = vmatpush.msra.mxu0 0.0
    %549 = vmatpush.msra.mxu0 0.0
    %550 = vmatpush.msra.mxu0 0.0
    %551 = vmatpush.msra.mxu0 0.0
    %552 = vmatpush.msra.mxu0 0.0
    %553 = vmatpush.msra.mxu0 0.0
    %554 = vmatpush.msra.mxu0 0.0
    %555 = vmatpush.msra.mxu0 0.0
    %556 = vmatpush.msra.mxu0 0.0
    %557 = vmatpush.msra.mxu0 0.0
    %558 = vmatpush.msra.mxu0 0.0
    %559 = vmatpush.msra.mxu0 %v536
    %560 = vmatpush.msra.mxu0 %v534
    %561 = vmatmul.f32.gmra.mxu0 %v540
    %v562 = vpop.f32.mrf.mxu0
    %v563 = vadd.f32 0.0, %v562
    %564 = vmatmul.f32.gmra.mxu0 %v543
    %v565 = vpop.f32.mrf.mxu0
    %v566 = vadd.f32 0.0, %v565
    %567 = vdwg.mxu0
    %568 = vrot.lane.b32.xlu0 %v166, 64
    %v569 = vpop.permute.xlu0 %568
    %v572 = vsel %vm206, %v563, 0
    %v575 = vsel %vm206, %v566, 0
    %577 = vmatpush.msra.mxu0 0.0
    %578 = vmatpush.msra.mxu0 0.0
    %579 = vmatpush.msra.mxu0 0.0
    %580 = vmatpush.msra.mxu0 0.0
    %581 = vmatpush.msra.mxu0 0.0
    %582 = vmatpush.msra.mxu0 0.0
    %583 = vmatpush.msra.mxu0 0.0
    %584 = vmatpush.msra.mxu0 0.0
    %585 = vmatpush.msra.mxu0 0.0
    %586 = vmatpush.msra.mxu0 0.0
    %587 = vmatpush.msra.mxu0 0.0
    %588 = vmatpush.msra.mxu0 0.0
    %589 = vmatpush.msra.mxu0 0.0
    %590 = vmatpush.msra.mxu0 0.0
    %591 = vmatpush.msra.mxu0 0.0
    %592 = vmatpush.msra.mxu0 %v569
    %593 = vmatmul.f32.gmra.mxu0 %v572
    %v594 = vpop.f32.mrf.mxu0
    %v595 = vadd.f32 0.0, %v594
    %596 = vmatmul.f32.gmra.mxu0 %v575
    %v597 = vpop.f32.mrf.mxu0
    %v598 = vadd.f32 0.0, %v597
    %599 = vdwg.mxu0
    %v600 = vadd.f32 %v461, %v595
    %v601 = vadd.f32 %v464, %v598
    %602 = vrot.lane.b32.xlu0 %v196, 104
    %v603 = vpop.permute.xlu0 %602
    %604 = vrot.lane.b32.xlu0 %v198, 104
    %v605 = vpop.permute.xlu0 %604
    %606 = vrot.lane.b32.xlu0 %v196, 72
    %v607 = vpop.permute.xlu0 %606
    %608 = vrot.lane.b32.xlu0 %v198, 72
    %v609 = vpop.permute.xlu0 %608
    %v610 = vsel %vm206, %v603, 0
    %v612 = vsel %vm206, %v605, 0
    %v614 = vsel %vm206, %v607, 0
    %v616 = vsel %vm206, %v609, 0
    %618 = vmatpush.xpose.msra.mxu0 0.0
    %619 = vmatpush.xpose.msra.mxu0 0.0
    %620 = vmatpush.xpose.msra.mxu0 0.0
    %621 = vmatpush.xpose.msra.mxu0 0.0
    %622 = vmatpush.xpose.msra.mxu0 0.0
    %623 = vmatpush.xpose.msra.mxu0 0.0
    %624 = vmatpush.xpose.msra.mxu0 0.0
    %625 = vmatpush.xpose.msra.mxu0 0.0
    %626 = vmatpush.xpose.msra.mxu0 0.0
    %627 = vmatpush.xpose.msra.mxu0 0.0
    %628 = vmatpush.xpose.msra.mxu0 0.0
    %629 = vmatpush.xpose.msra.mxu0 0.0
    %630 = vmatpush.xpose.msra.mxu0 0.0
    %631 = vmatpush.xpose.msra.mxu0 0.0
    %632 = vmatpush.xpose.msra.mxu0 %v616
    %633 = vmatpush.xpose.msra.mxu0 %v614
    %634 = vmatmul.f32.gmra.mxu0 %v610
    %v635 = vpop.f32.mrf.mxu0
    %v636 = vadd.f32 %v122, %v635
    %637 = vmatmul.f32.gmra.mxu0 %v612
    %v638 = vpop.f32.mrf.mxu0
    %v639 = vadd.f32 %v123, %v638
    %640 = vdwg.mxu0
    %v641 = vsel %vm238, %v636, -inf
    %642 = vmax.xlane.f32.xlu0 %v641
    %v643 = vpop.xlane.xlu0 %642
    %v644 = vsel %vm238, %v639, -inf
    %645 = vmax.xlane.f32.xlu0 %v644
    %v646 = vpop.xlane.xlu0 %645
    %v647 = vsub.f32 %v636, %v643
    %v648 = vsub.f32 %v639, %v646
    %v649 = vmul.f32 %v647, 1.442695
    %v650 = vpow.pop %v649
    %v651 = vmul.f32 %v648, 1.442695
    %v652 = vpow.pop %v651
    %v653 = vsel %vm238, %v650, 0.0
    %654 = vadd.xlane.f32.xlu0 %v653
    %v655 = vpop.xlane.xlu0 %654
    %v656 = vsel %vm238, %v652, 0.0
    %657 = vadd.xlane.f32.xlu0 %v656
    %v658 = vpop.xlane.xlu0 %657
    %v659 = vrcp.pop %v655
    %v660 = vrcp.pop %v658
    %v661 = vmul.f32 %v655, %v659
    %v662 = vmul.f32 %v658, %v660
    %v663 = vsub.f32 2.0, %v661
    %v664 = vsub.f32 2.0, %v662
    %v665 = vmul.f32 %v659, %v663
    %v666 = vmul.f32 %v660, %v664
    %v667 = vmul.f32 %v650, %v665
    %v668 = vmul.f32 %v652, %v666
    %669 = vrot.lane.b32.xlu0 %v196, 40
    %v670 = vpop.permute.xlu0 %669
    %671 = vrot.lane.b32.xlu0 %v198, 40
    %v672 = vpop.permute.xlu0 %671
    %v676 = vsel %vm238, %v667, 0
    %v679 = vsel %vm238, %v668, 0
    %681 = vmatpush.msra.mxu0 0.0
    %682 = vmatpush.msra.mxu0 0.0
    %683 = vmatpush.msra.mxu0 0.0
    %684 = vmatpush.msra.mxu0 0.0
    %685 = vmatpush.msra.mxu0 0.0
    %686 = vmatpush.msra.mxu0 0.0
    %687 = vmatpush.msra.mxu0 0.0
    %688 = vmatpush.msra.mxu0 0.0
    %689 = vmatpush.msra.mxu0 0.0
    %690 = vmatpush.msra.mxu0 0.0
    %691 = vmatpush.msra.mxu0 0.0
    %692 = vmatpush.msra.mxu0 0.0
    %693 = vmatpush.msra.mxu0 0.0
    %694 = vmatpush.msra.mxu0 0.0
    %695 = vmatpush.msra.mxu0 %v672
    %696 = vmatpush.msra.mxu0 %v670
    %697 = vmatmul.f32.gmra.mxu0 %v676
    %v698 = vpop.f32.mrf.mxu0
    %v699 = vadd.f32 0.0, %v698
    %700 = vmatmul.f32.gmra.mxu0 %v679
    %v701 = vpop.f32.mrf.mxu0
    %v702 = vadd.f32 0.0, %v701
    %703 = vdwg.mxu0
    %704 = vrot.lane.b32.xlu0 %v166, 32
    %v705 = vpop.permute.xlu0 %704
    %v708 = vsel %vm206, %v699, 0
    %v711 = vsel %vm206, %v702, 0
    %713 = vmatpush.msra.mxu0 0.0
    %714 = vmatpush.msra.mxu0 0.0
    %715 = vmatpush.msra.mxu0 0.0
    %716 = vmatpush.msra.mxu0 0.0
    %717 = vmatpush.msra.mxu0 0.0
    %718 = vmatpush.msra.mxu0 0.0
    %719 = vmatpush.msra.mxu0 0.0
    %720 = vmatpush.msra.mxu0 0.0
    %721 = vmatpush.msra.mxu0 0.0
    %722 = vmatpush.msra.mxu0 0.0
    %723 = vmatpush.msra.mxu0 0.0
    %724 = vmatpush.msra.mxu0 0.0
    %725 = vmatpush.msra.mxu0 0.0
    %726 = vmatpush.msra.mxu0 0.0
    %727 = vmatpush.msra.mxu0 0.0
    %728 = vmatpush.msra.mxu0 %v705
    %729 = vmatmul.f32.gmra.mxu0 %v708
    %v730 = vpop.f32.mrf.mxu0
    %v731 = vadd.f32 0.0, %v730
    %732 = vmatmul.f32.gmra.mxu0 %v711
    %v733 = vpop.f32.mrf.mxu0
    %v734 = vadd.f32 0.0, %v733
    %735 = vdwg.mxu0
    %v736 = vadd.f32 %v600, %v731
    %v737 = vadd.f32 %v601, %v734
    %v738 = vperm.slane %v155, 0
    %v739 = vadd.f32 %v736, %v738
    %v740 = vadd.f32 %v737, %v738
    %v741 = vadd.f32 %v739, %v118
    %v742 = vadd.f32 %v740, %v119
    %v743 = vsel %vm182, %v741, 0.0
    %744 = vadd.xlane.f32.xlu0 %v743
    %v745 = vpop.xlane.xlu0 %744
    %v746 = vsel %vm182, %v742, 0.0
    %747 = vadd.xlane.f32.xlu0 %v746
    %v748 = vpop.xlane.xlu0 %747
    %v749 = vrcp.pop 32.0
    %v750 = vmul.f32 32.0, %v749
    %v751 = vsub.f32 1.0, %v750
    %v752 = vmul.f32 %v749, %v751
    %v753 = vadd.f32 %v749, %v752
    %vm754 = vweird.f32 %v749
    %v755 = vsel %vm754, %v749, %v753
    %v756 = vmul.f32 %v745, %v755
    %v757 = vmul.f32 %v748, %v755
    %v758 = vsub.f32 %v741, %v756
    %v759 = vsub.f32 %v742, %v757
    %v760 = vmul.f32 %v758, %v758
    %v761 = vmul.f32 %v759, %v759
    %v762 = vsel %vm182, %v760, 0.0
    %763 = vadd.xlane.f32.xlu0 %v762
    %v764 = vpop.xlane.xlu0 %763
    %v765 = vsel %vm182, %v761, 0.0
    %766 = vadd.xlane.f32.xlu0 %v765
    %v767 = vpop.xlane.xlu0 %766
    %v768 = vmul.f32 %v764, %v755
    %v769 = vmul.f32 %v767, %v755
    %v770 = vadd.f32 %v768, 1e-05
    %v771 = vadd.f32 %v769, 1e-05
    %v772 = vrsqrt.pop %v770
    %v773 = vmul.f32 %v772, %v770
    %v774 = vmul.f32 %v773, %v772
    %v775 = vmul.f32 0.5, %v774
    %v776 = vsub.f32 1.5, %v775
    %v777 = vmul.f32 %v772, %v776
    %vm778 = vweird.f32 %v770
    %vm779 = vweird.f32 %v772
    %vm780 = vmor %vm778, %vm779
    %v781 = vsel %vm780, %v772, %v777
    %v782 = vrsqrt.pop %v771
    %v783 = vmul.f32 %v782, %v771
    %v784 = vmul.f32 %v783, %v782
    %v785 = vmul.f32 0.5, %v784
    %v786 = vsub.f32 1.5, %v785
    %v787 = vmul.f32 %v782, %v786
    %vm788 = vweird.f32 %v771
    %vm789 = vweird.f32 %v782
    %vm790 = vmor %vm788, %vm789
    %v791 = vsel %vm790, %v782, %v787
    %v792 = vmul.f32 %v758, %v781
    %v793 = vmul.f32 %v759, %v791
    %v794 = vperm.slane %v160, 0
    %v795 = vmul.f32 %v792, %v794
    %v796 = vmul.f32 %v793, %v794
    %v797 = vperm.slane %v161, 0
    %v798 = vadd.f32 %v795, %v797
    %v799 = vadd.f32 %v796, %v797
    %v800 = vpack.c.bf16 %v799, %v798
    %v801 = vperm.slane %v156, 0
    %v806 = vunpack.c.l.b16 %v134
    %v807 = vunpack.c.l.b16 %v135
    %v808 = vunpack.c.l.b16 %v136
    %v809 = vunpack.c.l.b16 %v137
    %v810 = vpack.c.b16 %v807, %v806
    %v811 = vpack.c.b16 %v809, %v808
    %v815 = vsel %vm182, %v800, 0
    %817 = vmatpush.bf16.msra.mxu0 0
    %818 = vmatpush.bf16.msra.mxu0 0
    %819 = vmatpush.bf16.msra.mxu0 0
    %820 = vmatpush.bf16.msra.mxu0 0
    %821 = vmatpush.bf16.msra.mxu0 0
    %822 = vmatpush.bf16.msra.mxu0 0
    %823 = vmatpush.bf16.msra.mxu0 %v811
    %824 = vmatpush.bf16.msra.mxu0 %v810
    %825 = vmatmul.bf16.gmra.mxu0 %v815
    %v826 = vpop.f32.mrf.mxu0
    %v827 = vadd.f32 %v801, %v826
    %v828 = vpop.f32.mrf.mxu0
    %v829 = vadd.f32 %v801, %v828
    %830 = vdwg.mxu0
    %v831 = vpack.c.bf16 %v121, %v120
    %832 = vrot.lane.b32.xlu0 %v810, 96
    %v833 = vpop.permute.xlu0 %832
    %834 = vrot.lane.b32.xlu0 %v811, 96
    %v835 = vpop.permute.xlu0 %834
    %839 = vrot.lane.b32.xlu0 %v801, 96
    %v840 = vpop.permute.xlu0 %839
    %v843 = vsel %vm182, %v831, 0
    %845 = vmatpush.bf16.msra.mxu0 0
    %846 = vmatpush.bf16.msra.mxu0 0
    %847 = vmatpush.bf16.msra.mxu0 0
    %848 = vmatpush.bf16.msra.mxu0 0
    %849 = vmatpush.bf16.msra.mxu0 0
    %850 = vmatpush.bf16.msra.mxu0 0
    %851 = vmatpush.bf16.msra.mxu0 %v835
    %852 = vmatpush.bf16.msra.mxu0 %v833
    %853 = vmatmul.bf16.gmra.mxu0 %v843
    %v854 = vpop.f32.mrf.mxu0
    %v855 = vadd.f32 %v840, %v854
    %v856 = vpop.f32.mrf.mxu0
    %v857 = vadd.f32 %v840, %v856
    %858 = vdwg.mxu0
    %v860 = vsel %vm206, %v827, 0
    %v863 = vsel %vm206, %v829, 0
    %v866 = vsel %vm206, %v855, 0
    %v869 = vsel %vm206, %v857, 0
    %871 = vmatpush.xpose.msra.mxu0 0.0
    %872 = vmatpush.xpose.msra.mxu0 0.0
    %873 = vmatpush.xpose.msra.mxu0 0.0
    %874 = vmatpush.xpose.msra.mxu0 0.0
    %875 = vmatpush.xpose.msra.mxu0 0.0
    %876 = vmatpush.xpose.msra.mxu0 0.0
    %877 = vmatpush.xpose.msra.mxu0 0.0
    %878 = vmatpush.xpose.msra.mxu0 0.0
    %879 = vmatpush.xpose.msra.mxu0 0.0
    %880 = vmatpush.xpose.msra.mxu0 0.0
    %881 = vmatpush.xpose.msra.mxu0 0.0
    %882 = vmatpush.xpose.msra.mxu0 0.0
    %883 = vmatpush.xpose.msra.mxu0 0.0
    %884 = vmatpush.xpose.msra.mxu0 0.0
    %885 = vmatpush.xpose.msra.mxu0 %v869
    %886 = vmatpush.xpose.msra.mxu0 %v866
    %887 = vmatmul.f32.gmra.mxu0 %v860
    %v888 = vpop.f32.mrf.mxu0
    %v889 = vadd.f32 %v124, %v888
    %890 = vmatmul.f32.gmra.mxu0 %v863
    %v891 = vpop.f32.mrf.mxu0
    %v892 = vadd.f32 %v125, %v891
    %893 = vdwg.mxu0
    %v894 = vsel %vm238, %v889, -inf
    %895 = vmax.xlane.f32.xlu0 %v894
    %v896 = vpop.xlane.xlu0 %895
    %v897 = vsel %vm238, %v892, -inf
    %898 = vmax.xlane.f32.xlu0 %v897
    %v899 = vpop.xlane.xlu0 %898
    %v900 = vsub.f32 %v889, %v896
    %v901 = vsub.f32 %v892, %v899
    %v902 = vmul.f32 %v900, 1.442695
    %v903 = vpow.pop %v902
    %v904 = vmul.f32 %v901, 1.442695
    %v905 = vpow.pop %v904
    %v906 = vsel %vm238, %v903, 0.0
    %907 = vadd.xlane.f32.xlu0 %v906
    %v908 = vpop.xlane.xlu0 %907
    %v909 = vsel %vm238, %v905, 0.0
    %910 = vadd.xlane.f32.xlu0 %v909
    %v911 = vpop.xlane.xlu0 %910
    %v912 = vrcp.pop %v908
    %v913 = vrcp.pop %v911
    %v914 = vmul.f32 %v908, %v912
    %v915 = vmul.f32 %v911, %v913
    %v916 = vsub.f32 2.0, %v914
    %v917 = vsub.f32 2.0, %v915
    %v918 = vmul.f32 %v912, %v916
    %v919 = vmul.f32 %v913, %v917
    %v920 = vmul.f32 %v903, %v918
    %v921 = vmul.f32 %v905, %v919
    %922 = vrot.lane.b32.xlu0 %v855, 96
    %v923 = vpop.permute.xlu0 %922
    %924 = vrot.lane.b32.xlu0 %v857, 96
    %v925 = vpop.permute.xlu0 %924
    %v929 = vsel %vm238, %v920, 0
    %v932 = vsel %vm238, %v921, 0
    %934 = vmatpush.msra.mxu0 0.0
    %935 = vmatpush.msra.mxu0 0.0
    %936 = vmatpush.msra.mxu0 0.0
    %937 = vmatpush.msra.mxu0 0.0
    %938 = vmatpush.msra.mxu0 0.0
    %939 = vmatpush.msra.mxu0 0.0
    %940 = vmatpush.msra.mxu0 0.0
    %941 = vmatpush.msra.mxu0 0.0
    %942 = vmatpush.msra.mxu0 0.0
    %943 = vmatpush.msra.mxu0 0.0
    %944 = vmatpush.msra.mxu0 0.0
    %945 = vmatpush.msra.mxu0 0.0
    %946 = vmatpush.msra.mxu0 0.0
    %947 = vmatpush.msra.mxu0 0.0
    %948 = vmatpush.msra.mxu0 %v925
    %949 = vmatpush.msra.mxu0 %v923
    %950 = vmatmul.f32.gmra.mxu0 %v929
    %v951 = vpop.f32.mrf.mxu0
    %v952 = vadd.f32 0.0, %v951
    %953 = vmatmul.f32.gmra.mxu0 %v932
    %v954 = vpop.f32.mrf.mxu0
    %v955 = vadd.f32 0.0, %v954
    %956 = vdwg.mxu0
    %957 = vrot.lane.b32.xlu0 %v827, 120
    %v958 = vpop.permute.xlu0 %957
    %959 = vrot.lane.b32.xlu0 %v829, 120
    %v960 = vpop.permute.xlu0 %959
    %961 = vrot.lane.b32.xlu0 %v855, 120
    %v962 = vpop.permute.xlu0 %961
    %963 = vrot.lane.b32.xlu0 %v857, 120
    %v964 = vpop.permute.xlu0 %963
    %v965 = vsel %vm206, %v958, 0
    %v967 = vsel %vm206, %v960, 0
    %v969 = vsel %vm206, %v962, 0
    %v971 = vsel %vm206, %v964, 0
    %973 = vmatpush.xpose.msra.mxu0 0.0
    %974 = vmatpush.xpose.msra.mxu0 0.0
    %975 = vmatpush.xpose.msra.mxu0 0.0
    %976 = vmatpush.xpose.msra.mxu0 0.0
    %977 = vmatpush.xpose.msra.mxu0 0.0
    %978 = vmatpush.xpose.msra.mxu0 0.0
    %979 = vmatpush.xpose.msra.mxu0 0.0
    %980 = vmatpush.xpose.msra.mxu0 0.0
    %981 = vmatpush.xpose.msra.mxu0 0.0
    %982 = vmatpush.xpose.msra.mxu0 0.0
    %983 = vmatpush.xpose.msra.mxu0 0.0
    %984 = vmatpush.xpose.msra.mxu0 0.0
    %985 = vmatpush.xpose.msra.mxu0 0.0
    %986 = vmatpush.xpose.msra.mxu0 0.0
    %987 = vmatpush.xpose.msra.mxu0 %v971
    %988 = vmatpush.xpose.msra.mxu0 %v969
    %989 = vmatmul.f32.gmra.mxu0 %v965
    %v990 = vpop.f32.mrf.mxu0
    %v991 = vadd.f32 %v124, %v990
    %992 = vmatmul.f32.gmra.mxu0 %v967
    %v993 = vpop.f32.mrf.mxu0
    %v994 = vadd.f32 %v125, %v993
    %995 = vdwg.mxu0
    %v996 = vsel %vm238, %v991, -inf
    %997 = vmax.xlane.f32.xlu0 %v996
    %v998 = vpop.xlane.xlu0 %997
    %v999 = vsel %vm238, %v994, -inf
    %1000 = vmax.xlane.f32.xlu0 %v999
    %v1001 = vpop.xlane.xlu0 %1000
    %v1002 = vsub.f32 %v991, %v998
    %v1003 = vsub.f32 %v994, %v1001
    %v1004 = vmul.f32 %v1002, 1.442695
    %v1005 = vpow.pop %v1004
    %v1006 = vmul.f32 %v1003, 1.442695
    %v1007 = vpow.pop %v1006
    %v1008 = vsel %vm238, %v1005, 0.0
    %1009 = vadd.xlane.f32.xlu0 %v1008
    %v1010 = vpop.xlane.xlu0 %1009
    %v1011 = vsel %vm238, %v1007, 0.0
    %1012 = vadd.xlane.f32.xlu0 %v1011
    %v1013 = vpop.xlane.xlu0 %1012
    %v1014 = vrcp.pop %v1010
    %v1015 = vrcp.pop %v1013
    %v1016 = vmul.f32 %v1010, %v1014
    %v1017 = vmul.f32 %v1013, %v1015
    %v1018 = vsub.f32 2.0, %v1016
    %v1019 = vsub.f32 2.0, %v1017
    %v1020 = vmul.f32 %v1014, %v1018
    %v1021 = vmul.f32 %v1015, %v1019
    %v1022 = vmul.f32 %v1005, %v1020
    %v1023 = vmul.f32 %v1007, %v1021
    %1024 = vrot.lane.b32.xlu0 %v855, 88
    %v1025 = vpop.permute.xlu0 %1024
    %1026 = vrot.lane.b32.xlu0 %v857, 88
    %v1027 = vpop.permute.xlu0 %1026
    %v1031 = vsel %vm238, %v1022, 0
    %v1034 = vsel %vm238, %v1023, 0
    %1036 = vmatpush.msra.mxu0 0.0
    %1037 = vmatpush.msra.mxu0 0.0
    %1038 = vmatpush.msra.mxu0 0.0
    %1039 = vmatpush.msra.mxu0 0.0
    %1040 = vmatpush.msra.mxu0 0.0
    %1041 = vmatpush.msra.mxu0 0.0
    %1042 = vmatpush.msra.mxu0 0.0
    %1043 = vmatpush.msra.mxu0 0.0
    %1044 = vmatpush.msra.mxu0 0.0
    %1045 = vmatpush.msra.mxu0 0.0
    %1046 = vmatpush.msra.mxu0 0.0
    %1047 = vmatpush.msra.mxu0 0.0
    %1048 = vmatpush.msra.mxu0 0.0
    %1049 = vmatpush.msra.mxu0 0.0
    %1050 = vmatpush.msra.mxu0 %v1027
    %1051 = vmatpush.msra.mxu0 %v1025
    %1052 = vmatmul.f32.gmra.mxu0 %v1031
    %v1053 = vpop.f32.mrf.mxu0
    %v1054 = vadd.f32 0.0, %v1053
    %1055 = vmatmul.f32.gmra.mxu0 %v1034
    %v1056 = vpop.f32.mrf.mxu0
    %v1057 = vadd.f32 0.0, %v1056
    %1058 = vdwg.mxu0
    %1060 = vrot.lane.b32.xlu0 %v167, 96
    %v1061 = vpop.permute.xlu0 %1060
    %v1064 = vsel %vm206, %v1054, 0
    %v1067 = vsel %vm206, %v1057, 0
    %1069 = vmatpush.msra.mxu0 0.0
    %1070 = vmatpush.msra.mxu0 0.0
    %1071 = vmatpush.msra.mxu0 0.0
    %1072 = vmatpush.msra.mxu0 0.0
    %1073 = vmatpush.msra.mxu0 0.0
    %1074 = vmatpush.msra.mxu0 0.0
    %1075 = vmatpush.msra.mxu0 0.0
    %1076 = vmatpush.msra.mxu0 0.0
    %1077 = vmatpush.msra.mxu0 0.0
    %1078 = vmatpush.msra.mxu0 0.0
    %1079 = vmatpush.msra.mxu0 0.0
    %1080 = vmatpush.msra.mxu0 0.0
    %1081 = vmatpush.msra.mxu0 0.0
    %1082 = vmatpush.msra.mxu0 0.0
    %1083 = vmatpush.msra.mxu0 0.0
    %1084 = vmatpush.msra.mxu0 %v1061
    %1085 = vmatmul.f32.gmra.mxu0 %v1064
    %v1086 = vpop.f32.mrf.mxu0
    %v1087 = vadd.f32 0.0, %v1086
    %1088 = vmatmul.f32.gmra.mxu0 %v1067
    %v1089 = vpop.f32.mrf.mxu0
    %v1090 = vadd.f32 0.0, %v1089
    %1091 = vdwg.mxu0
    %v1093 = vsel %vm206, %v952, 0
    %v1096 = vsel %vm206, %v955, 0
    %1098 = vmatpush.msra.mxu0 0.0
    %1099 = vmatpush.msra.mxu0 0.0
    %1100 = vmatpush.msra.mxu0 0.0
    %1101 = vmatpush.msra.mxu0 0.0
    %1102 = vmatpush.msra.mxu0 0.0
    %1103 = vmatpush.msra.mxu0 0.0
    %1104 = vmatpush.msra.mxu0 0.0
    %1105 = vmatpush.msra.mxu0 0.0
    %1106 = vmatpush.msra.mxu0 0.0
    %1107 = vmatpush.msra.mxu0 0.0
    %1108 = vmatpush.msra.mxu0 0.0
    %1109 = vmatpush.msra.mxu0 0.0
    %1110 = vmatpush.msra.mxu0 0.0
    %1111 = vmatpush.msra.mxu0 0.0
    %1112 = vmatpush.msra.mxu0 0.0
    %1113 = vmatpush.msra.mxu0 %v167
    %1114 = vmatmul.f32.gmra.mxu0 %v1093
    %v1115 = vpop.f32.mrf.mxu0
    %v1116 = vadd.f32 %v1087, %v1115
    %1117 = vmatmul.f32.gmra.mxu0 %v1096
    %v1118 = vpop.f32.mrf.mxu0
    %v1119 = vadd.f32 %v1090, %v1118
    %1120 = vdwg.mxu0
    %1121 = vrot.lane.b32.xlu0 %v827, 112
    %v1122 = vpop.permute.xlu0 %1121
    %1123 = vrot.lane.b32.xlu0 %v829, 112
    %v1124 = vpop.permute.xlu0 %1123
    %1125 = vrot.lane.b32.xlu0 %v855, 112
    %v1126 = vpop.permute.xlu0 %1125
    %1127 = vrot.lane.b32.xlu0 %v857, 112
    %v1128 = vpop.permute.xlu0 %1127
    %v1129 = vsel %vm206, %v1122, 0
    %v1131 = vsel %vm206, %v1124, 0
    %v1133 = vsel %vm206, %v1126, 0
    %v1135 = vsel %vm206, %v1128, 0
    %1137 = vmatpush.xpose.msra.mxu0 0.0
    %1138 = vmatpush.xpose.msra.mxu0 0.0
    %1139 = vmatpush.xpose.msra.mxu0 0.0
    %1140 = vmatpush.xpose.msra.mxu0 0.0
    %1141 = vmatpush.xpose.msra.mxu0 0.0
    %1142 = vmatpush.xpose.msra.mxu0 0.0
    %1143 = vmatpush.xpose.msra.mxu0 0.0
    %1144 = vmatpush.xpose.msra.mxu0 0.0
    %1145 = vmatpush.xpose.msra.mxu0 0.0
    %1146 = vmatpush.xpose.msra.mxu0 0.0
    %1147 = vmatpush.xpose.msra.mxu0 0.0
    %1148 = vmatpush.xpose.msra.mxu0 0.0
    %1149 = vmatpush.xpose.msra.mxu0 0.0
    %1150 = vmatpush.xpose.msra.mxu0 0.0
    %1151 = vmatpush.xpose.msra.mxu0 %v1135
    %1152 = vmatpush.xpose.msra.mxu0 %v1133
    %1153 = vmatmul.f32.gmra.mxu0 %v1129
    %v1154 = vpop.f32.mrf.mxu0
    %v1155 = vadd.f32 %v124, %v1154
    %1156 = vmatmul.f32.gmra.mxu0 %v1131
    %v1157 = vpop.f32.mrf.mxu0
    %v1158 = vadd.f32 %v125, %v1157
    %1159 = vdwg.mxu0
    %v1160 = vsel %vm238, %v1155, -inf
    %1161 = vmax.xlane.f32.xlu0 %v1160
    %v1162 = vpop.xlane.xlu0 %1161
    %v1163 = vsel %vm238, %v1158, -inf
    %1164 = vmax.xlane.f32.xlu0 %v1163
    %v1165 = vpop.xlane.xlu0 %1164
    %v1166 = vsub.f32 %v1155, %v1162
    %v1167 = vsub.f32 %v1158, %v1165
    %v1168 = vmul.f32 %v1166, 1.442695
    %v1169 = vpow.pop %v1168
    %v1170 = vmul.f32 %v1167, 1.442695
    %v1171 = vpow.pop %v1170
    %v1172 = vsel %vm238, %v1169, 0.0
    %1173 = vadd.xlane.f32.xlu0 %v1172
    %v1174 = vpop.xlane.xlu0 %1173
    %v1175 = vsel %vm238, %v1171, 0.0
    %1176 = vadd.xlane.f32.xlu0 %v1175
    %v1177 = vpop.xlane.xlu0 %1176
    %v1178 = vrcp.pop %v1174
    %v1179 = vrcp.pop %v1177
    %v1180 = vmul.f32 %v1174, %v1178
    %v1181 = vmul.f32 %v1177, %v1179
    %v1182 = vsub.f32 2.0, %v1180
    %v1183 = vsub.f32 2.0, %v1181
    %v1184 = vmul.f32 %v1178, %v1182
    %v1185 = vmul.f32 %v1179, %v1183
    %v1186 = vmul.f32 %v1169, %v1184
    %v1187 = vmul.f32 %v1171, %v1185
    %1188 = vrot.lane.b32.xlu0 %v855, 80
    %v1189 = vpop.permute.xlu0 %1188
    %1190 = vrot.lane.b32.xlu0 %v857, 80
    %v1191 = vpop.permute.xlu0 %1190
    %v1195 = vsel %vm238, %v1186, 0
    %v1198 = vsel %vm238, %v1187, 0
    %1200 = vmatpush.msra.mxu0 0.0
    %1201 = vmatpush.msra.mxu0 0.0
    %1202 = vmatpush.msra.mxu0 0.0
    %1203 = vmatpush.msra.mxu0 0.0
    %1204 = vmatpush.msra.mxu0 0.0
    %1205 = vmatpush.msra.mxu0 0.0
    %1206 = vmatpush.msra.mxu0 0.0
    %1207 = vmatpush.msra.mxu0 0.0
    %1208 = vmatpush.msra.mxu0 0.0
    %1209 = vmatpush.msra.mxu0 0.0
    %1210 = vmatpush.msra.mxu0 0.0
    %1211 = vmatpush.msra.mxu0 0.0
    %1212 = vmatpush.msra.mxu0 0.0
    %1213 = vmatpush.msra.mxu0 0.0
    %1214 = vmatpush.msra.mxu0 %v1191
    %1215 = vmatpush.msra.mxu0 %v1189
    %1216 = vmatmul.f32.gmra.mxu0 %v1195
    %v1217 = vpop.f32.mrf.mxu0
    %v1218 = vadd.f32 0.0, %v1217
    %1219 = vmatmul.f32.gmra.mxu0 %v1198
    %v1220 = vpop.f32.mrf.mxu0
    %v1221 = vadd.f32 0.0, %v1220
    %1222 = vdwg.mxu0
    %1223 = vrot.lane.b32.xlu0 %v167, 64
    %v1224 = vpop.permute.xlu0 %1223
    %v1227 = vsel %vm206, %v1218, 0
    %v1230 = vsel %vm206, %v1221, 0
    %1232 = vmatpush.msra.mxu0 0.0
    %1233 = vmatpush.msra.mxu0 0.0
    %1234 = vmatpush.msra.mxu0 0.0
    %1235 = vmatpush.msra.mxu0 0.0
    %1236 = vmatpush.msra.mxu0 0.0
    %1237 = vmatpush.msra.mxu0 0.0
    %1238 = vmatpush.msra.mxu0 0.0
    %1239 = vmatpush.msra.mxu0 0.0
    %1240 = vmatpush.msra.mxu0 0.0
    %1241 = vmatpush.msra.mxu0 0.0
    %1242 = vmatpush.msra.mxu0 0.0
    %1243 = vmatpush.msra.mxu0 0.0
    %1244 = vmatpush.msra.mxu0 0.0
    %1245 = vmatpush.msra.mxu0 0.0
    %1246 = vmatpush.msra.mxu0 0.0
    %1247 = vmatpush.msra.mxu0 %v1224
    %1248 = vmatmul.f32.gmra.mxu0 %v1227
    %v1249 = vpop.f32.mrf.mxu0
    %v1250 = vadd.f32 0.0, %v1249
    %1251 = vmatmul.f32.gmra.mxu0 %v1230
    %v1252 = vpop.f32.mrf.mxu0
    %v1253 = vadd.f32 0.0, %v1252
    %1254 = vdwg.mxu0
    %v1255 = vadd.f32 %v1116, %v1250
    %v1256 = vadd.f32 %v1119, %v1253
    %1257 = vrot.lane.b32.xlu0 %v827, 104
    %v1258 = vpop.permute.xlu0 %1257
    %1259 = vrot.lane.b32.xlu0 %v829, 104
    %v1260 = vpop.permute.xlu0 %1259
    %1261 = vrot.lane.b32.xlu0 %v855, 104
    %v1262 = vpop.permute.xlu0 %1261
    %1263 = vrot.lane.b32.xlu0 %v857, 104
    %v1264 = vpop.permute.xlu0 %1263
    %v1265 = vsel %vm206, %v1258, 0
    %v1267 = vsel %vm206, %v1260, 0
    %v1269 = vsel %vm206, %v1262, 0
    %v1271 = vsel %vm206, %v1264, 0
    %1273 = vmatpush.xpose.msra.mxu0 0.0
    %1274 = vmatpush.xpose.msra.mxu0 0.0
    %1275 = vmatpush.xpose.msra.mxu0 0.0
    %1276 = vmatpush.xpose.msra.mxu0 0.0
    %1277 = vmatpush.xpose.msra.mxu0 0.0
    %1278 = vmatpush.xpose.msra.mxu0 0.0
    %1279 = vmatpush.xpose.msra.mxu0 0.0
    %1280 = vmatpush.xpose.msra.mxu0 0.0
    %1281 = vmatpush.xpose.msra.mxu0 0.0
    %1282 = vmatpush.xpose.msra.mxu0 0.0
    %1283 = vmatpush.xpose.msra.mxu0 0.0
    %1284 = vmatpush.xpose.msra.mxu0 0.0
    %1285 = vmatpush.xpose.msra.mxu0 0.0
    %1286 = vmatpush.xpose.msra.mxu0 0.0
    %1287 = vmatpush.xpose.msra.mxu0 %v1271
    %1288 = vmatpush.xpose.msra.mxu0 %v1269
    %1289 = vmatmul.f32.gmra.mxu0 %v1265
    %v1290 = vpop.f32.mrf.mxu0
    %v1291 = vadd.f32 %v124, %v1290
    %1292 = vmatmul.f32.gmra.mxu0 %v1267
    %v1293 = vpop.f32.mrf.mxu0
    %v1294 = vadd.f32 %v125, %v1293
    %1295 = vdwg.mxu0
    %v1296 = vsel %vm238, %v1291, -inf
    %1297 = vmax.xlane.f32.xlu0 %v1296
    %v1298 = vpop.xlane.xlu0 %1297
    %v1299 = vsel %vm238, %v1294, -inf
    %1300 = vmax.xlane.f32.xlu0 %v1299
    %v1301 = vpop.xlane.xlu0 %1300
    %v1302 = vsub.f32 %v1291, %v1298
    %v1303 = vsub.f32 %v1294, %v1301
    %v1304 = vmul.f32 %v1302, 1.442695
    %v1305 = vpow.pop %v1304
    %v1306 = vmul.f32 %v1303, 1.442695
    %v1307 = vpow.pop %v1306
    %v1308 = vsel %vm238, %v1305, 0.0
    %1309 = vadd.xlane.f32.xlu0 %v1308
    %v1310 = vpop.xlane.xlu0 %1309
    %v1311 = vsel %vm238, %v1307, 0.0
    %1312 = vadd.xlane.f32.xlu0 %v1311
    %v1313 = vpop.xlane.xlu0 %1312
    %v1314 = vrcp.pop %v1310
    %v1315 = vrcp.pop %v1313
    %v1316 = vmul.f32 %v1310, %v1314
    %v1317 = vmul.f32 %v1313, %v1315
    %v1318 = vsub.f32 2.0, %v1316
    %v1319 = vsub.f32 2.0, %v1317
    %v1320 = vmul.f32 %v1314, %v1318
    %v1321 = vmul.f32 %v1315, %v1319
    %v1322 = vmul.f32 %v1305, %v1320
    %v1323 = vmul.f32 %v1307, %v1321
    %1324 = vrot.lane.b32.xlu0 %v855, 72
    %v1325 = vpop.permute.xlu0 %1324
    %1326 = vrot.lane.b32.xlu0 %v857, 72
    %v1327 = vpop.permute.xlu0 %1326
    %v1331 = vsel %vm238, %v1322, 0
    %v1334 = vsel %vm238, %v1323, 0
    %1336 = vmatpush.msra.mxu0 0.0
    %1337 = vmatpush.msra.mxu0 0.0
    %1338 = vmatpush.msra.mxu0 0.0
    %1339 = vmatpush.msra.mxu0 0.0
    %1340 = vmatpush.msra.mxu0 0.0
    %1341 = vmatpush.msra.mxu0 0.0
    %1342 = vmatpush.msra.mxu0 0.0
    %1343 = vmatpush.msra.mxu0 0.0
    %1344 = vmatpush.msra.mxu0 0.0
    %1345 = vmatpush.msra.mxu0 0.0
    %1346 = vmatpush.msra.mxu0 0.0
    %1347 = vmatpush.msra.mxu0 0.0
    %1348 = vmatpush.msra.mxu0 0.0
    %1349 = vmatpush.msra.mxu0 0.0
    %1350 = vmatpush.msra.mxu0 %v1327
    %1351 = vmatpush.msra.mxu0 %v1325
    %1352 = vmatmul.f32.gmra.mxu0 %v1331
    %v1353 = vpop.f32.mrf.mxu0
    %v1354 = vadd.f32 0.0, %v1353
    %1355 = vmatmul.f32.gmra.mxu0 %v1334
    %v1356 = vpop.f32.mrf.mxu0
    %v1357 = vadd.f32 0.0, %v1356
    %1358 = vdwg.mxu0
    %1359 = vrot.lane.b32.xlu0 %v167, 32
    %v1360 = vpop.permute.xlu0 %1359
    %v1363 = vsel %vm206, %v1354, 0
    %v1366 = vsel %vm206, %v1357, 0
    %1368 = vmatpush.msra.mxu0 0.0
    %1369 = vmatpush.msra.mxu0 0.0
    %1370 = vmatpush.msra.mxu0 0.0
    %1371 = vmatpush.msra.mxu0 0.0
    %1372 = vmatpush.msra.mxu0 0.0
    %1373 = vmatpush.msra.mxu0 0.0
    %1374 = vmatpush.msra.mxu0 0.0
    %1375 = vmatpush.msra.mxu0 0.0
    %1376 = vmatpush.msra.mxu0 0.0
    %1377 = vmatpush.msra.mxu0 0.0
    %1378 = vmatpush.msra.mxu0 0.0
    %1379 = vmatpush.msra.mxu0 0.0
    %1380 = vmatpush.msra.mxu0 0.0
    %1381 = vmatpush.msra.mxu0 0.0
    %1382 = vmatpush.msra.mxu0 0.0
    %1383 = vmatpush.msra.mxu0 %v1360
    %1384 = vmatmul.f32.gmra.mxu0 %v1363
    %v1385 = vpop.f32.mrf.mxu0
    %v1386 = vadd.f32 0.0, %v1385
    %1387 = vmatmul.f32.gmra.mxu0 %v1366
    %v1388 = vpop.f32.mrf.mxu0
    %v1389 = vadd.f32 0.0, %v1388
    %1390 = vdwg.mxu0
    %v1391 = vadd.f32 %v1255, %v1386
    %v1392 = vadd.f32 %v1256, %v1389
    %v1393 = vperm.slane %v157, 0
    %v1394 = vadd.f32 %v1391, %v1393
    %v1395 = vadd.f32 %v1392, %v1393
    %v1396 = vadd.f32 %v1394, %v798
    %v1397 = vadd.f32 %v1395, %v799
    %v1398 = vsel %vm182, %v1396, 0.0
    %1399 = vadd.xlane.f32.xlu0 %v1398
    %v1400 = vpop.xlane.xlu0 %1399
    %v1401 = vsel %vm182, %v1397, 0.0
    %1402 = vadd.xlane.f32.xlu0 %v1401
    %v1403 = vpop.xlane.xlu0 %1402
    %v1404 = vmul.f32 %v1400, %v755
    %v1405 = vmul.f32 %v1403, %v755
    %v1406 = vsub.f32 %v1396, %v1404
    %v1407 = vsub.f32 %v1397, %v1405
    %v1408 = vmul.f32 %v1406, %v1406
    %v1409 = vmul.f32 %v1407, %v1407
    %v1410 = vsel %vm182, %v1408, 0.0
    %1411 = vadd.xlane.f32.xlu0 %v1410
    %v1412 = vpop.xlane.xlu0 %1411
    %v1413 = vsel %vm182, %v1409, 0.0
    %1414 = vadd.xlane.f32.xlu0 %v1413
    %v1415 = vpop.xlane.xlu0 %1414
    %v1416 = vmul.f32 %v1412, %v755
    %v1417 = vmul.f32 %v1415, %v755
    %v1418 = vadd.f32 %v1416, 1e-05
    %v1419 = vadd.f32 %v1417, 1e-05
    %v1420 = vrsqrt.pop %v1418
    %v1421 = vmul.f32 %v1420, %v1418
    %v1422 = vmul.f32 %v1421, %v1420
    %v1423 = vmul.f32 0.5, %v1422
    %v1424 = vsub.f32 1.5, %v1423
    %v1425 = vmul.f32 %v1420, %v1424
    %vm1426 = vweird.f32 %v1418
    %vm1427 = vweird.f32 %v1420
    %vm1428 = vmor %vm1426, %vm1427
    %v1429 = vsel %vm1428, %v1420, %v1425
    %v1430 = vrsqrt.pop %v1419
    %v1431 = vmul.f32 %v1430, %v1419
    %v1432 = vmul.f32 %v1431, %v1430
    %v1433 = vmul.f32 0.5, %v1432
    %v1434 = vsub.f32 1.5, %v1433
    %v1435 = vmul.f32 %v1430, %v1434
    %vm1436 = vweird.f32 %v1419
    %vm1437 = vweird.f32 %v1430
    %vm1438 = vmor %vm1436, %vm1437
    %v1439 = vsel %vm1438, %v1430, %v1435
    %v1440 = vmul.f32 %v1406, %v1429
    %v1441 = vmul.f32 %v1407, %v1439
    %v1442 = vperm.slane %v162, 0
    %v1443 = vmul.f32 %v1440, %v1442
    %v1444 = vmul.f32 %v1441, %v1442
    %v1445 = vperm.slane %v163, 0
    %v1446 = vadd.f32 %v1443, %v1445
    %v1447 = vadd.f32 %v1444, %v1445
    %v1448 = vpack.c.bf16 %v1447, %v1446
    %v1449 = vperm.slane %v158, 0
    %v1454 = vunpack.c.l.b16 %v126
    %v1455 = vunpack.c.l.b16 %v127
    %v1456 = vunpack.c.l.b16 %v128
    %v1457 = vunpack.c.l.b16 %v129
    %v1458 = vpack.c.b16 %v1455, %v1454
    %v1459 = vpack.c.b16 %v1457, %v1456
    %v1463 = vsel %vm182, %v1448, 0
    %1465 = vmatpush.bf16.msra.mxu0 0
    %1466 = vmatpush.bf16.msra.mxu0 0
    %1467 = vmatpush.bf16.msra.mxu0 0
    %1468 = vmatpush.bf16.msra.mxu0 0
    %1469 = vmatpush.bf16.msra.mxu0 0
    %1470 = vmatpush.bf16.msra.mxu0 0
    %1471 = vmatpush.bf16.msra.mxu0 %v1459
    %1472 = vmatpush.bf16.msra.mxu0 %v1458
    %1473 = vmatmul.bf16.gmra.mxu0 %v1463
    %v1474 = vpop.f32.mrf.mxu0
    %v1475 = vadd.f32 %v1449, %v1474
    %v1476 = vpop.f32.mrf.mxu0
    %v1477 = vadd.f32 %v1449, %v1476
    %1478 = vdwg.mxu0
    %v1479 = vmax.f32 %v1475, 0.0
    %v1480 = vmax.f32 %v1477, 0.0
    %v1481 = vpack.c.bf16 %v1480, %v1479
    %v1482 = vperm.slane %v159, 0
    %v1499 = vunpack.c.l.b16 %v138
    %v1500 = vunpack.c.l.b16 %v139
    %v1501 = vunpack.c.l.b16 %v140
    %v1502 = vunpack.c.l.b16 %v141
    %v1503 = vunpack.c.l.b16 %v142
    %v1504 = vunpack.c.l.b16 %v143
    %v1505 = vunpack.c.l.b16 %v144
    %v1506 = vunpack.c.l.b16 %v145
    %v1507 = vunpack.c.l.b16 %v146
    %v1508 = vunpack.c.l.b16 %v147
    %v1509 = vunpack.c.l.b16 %v148
    %v1510 = vunpack.c.l.b16 %v149
    %v1511 = vunpack.c.l.b16 %v150
    %v1512 = vunpack.c.l.b16 %v151
    %v1513 = vunpack.c.l.b16 %v152
    %v1514 = vunpack.c.l.b16 %v153
    %v1515 = vpack.c.b16 %v1500, %v1499
    %v1516 = vpack.c.b16 %v1502, %v1501
    %v1517 = vpack.c.b16 %v1504, %v1503
    %v1518 = vpack.c.b16 %v1506, %v1505
    %v1519 = vpack.c.b16 %v1508, %v1507
    %v1520 = vpack.c.b16 %v1510, %v1509
    %v1521 = vpack.c.b16 %v1512, %v1511
    %v1522 = vpack.c.b16 %v1514, %v1513
    %1531 = vmatpush.bf16.msra.mxu0 %v1522
    %1532 = vmatpush.bf16.msra.mxu0 %v1521
    %1533 = vmatpush.bf16.msra.mxu0 %v1520
    %1534 = vmatpush.bf16.msra.mxu0 %v1519
    %1535 = vmatpush.bf16.msra.mxu0 %v1518
    %1536 = vmatpush.bf16.msra.mxu0 %v1517
    %1537 = vmatpush.bf16.msra.mxu0 %v1516
    %1538 = vmatpush.bf16.msra.mxu0 %v1515
    %1539 = vmatmul.bf16.gmra.mxu0 %v1481
    %v1540 = vpop.f32.mrf.mxu0
    %v1541 = vadd.f32 %v1482, %v1540
    %v1542 = vpop.f32.mrf.mxu0
    %v1543 = vadd.f32 %v1482, %v1542
    %1544 = vdwg.mxu0
    %v1545 = vadd.f32 %v1541, %v1446
    %v1546 = vadd.f32 %v1543, %v1447
    %v1547 = vsel %vm182, %v1545, 0.0
    %1548 = vadd.xlane.f32.xlu0 %v1547
    %v1549 = vpop.xlane.xlu0 %1548
    %v1550 = vsel %vm182, %v1546, 0.0
    %1551 = vadd.xlane.f32.xlu0 %v1550
    %v1552 = vpop.xlane.xlu0 %1551
    %v1553 = vmul.f32 %v1549, %v755
    %v1554 = vmul.f32 %v1552, %v755
    %v1555 = vsub.f32 %v1545, %v1553
    %v1556 = vsub.f32 %v1546, %v1554
    %v1557 = vmul.f32 %v1555, %v1555
    %v1558 = vmul.f32 %v1556, %v1556
    %v1559 = vsel %vm182, %v1557, 0.0
    %1560 = vadd.xlane.f32.xlu0 %v1559
    %v1561 = vpop.xlane.xlu0 %1560
    %v1562 = vsel %vm182, %v1558, 0.0
    %1563 = vadd.xlane.f32.xlu0 %v1562
    %v1564 = vpop.xlane.xlu0 %1563
    %v1565 = vmul.f32 %v1561, %v755
    %v1566 = vmul.f32 %v1564, %v755
    %v1567 = vadd.f32 %v1565, 1e-05
    %v1568 = vadd.f32 %v1566, 1e-05
    %v1569 = vrsqrt.pop %v1567
    %v1570 = vmul.f32 %v1569, %v1567
    %v1571 = vmul.f32 %v1570, %v1569
    %v1572 = vmul.f32 0.5, %v1571
    %v1573 = vsub.f32 1.5, %v1572
    %v1574 = vmul.f32 %v1569, %v1573
    %vm1575 = vweird.f32 %v1567
    %vm1576 = vweird.f32 %v1569
    %vm1577 = vmor %vm1575, %vm1576
    %v1578 = vsel %vm1577, %v1569, %v1574
    %v1579 = vrsqrt.pop %v1568
    %v1580 = vmul.f32 %v1579, %v1568
    %v1581 = vmul.f32 %v1580, %v1579
    %v1582 = vmul.f32 0.5, %v1581
    %v1583 = vsub.f32 1.5, %v1582
    %v1584 = vmul.f32 %v1579, %v1583
    %vm1585 = vweird.f32 %v1568
    %vm1586 = vweird.f32 %v1579
    %vm1587 = vmor %vm1585, %vm1586
    %v1588 = vsel %vm1587, %v1579, %v1584
    %v1589 = vmul.f32 %v1555, %v1578
    %v1590 = vmul.f32 %v1556, %v1588
    %v1591 = vperm.slane %v164, 0
    %v1592 = vmul.f32 %v1589, %v1591
    %v1593 = vmul.f32 %v1590, %v1591
    %v1594 = vperm.slane %v165, 0
    %v1595 = vadd.f32 %v1592, %v1594
    %v1596 = vadd.f32 %v1593, %v1594
    %v1597 = vsel %vm182, %v1595, 0.0
    %v1598 = vsel %vm182, %v1596, 0.0
    %1599 = vst [vmem:[%s6] sm:$0xff] %v1597
    %1600 = vst [vmem:[%s6 + $0x8] sm:$0xff] %v1598
    // Predicated region
    $region50: #{fwd.1} parent=1 // pred_check
      _
    $region51: #{fwd.1} parent=1 // pred_check_branch
      %1602 = sbr.rel (0) target = $region53
    $region52: #{fwd.1} parent=1 // pred_region
      _
    $region53: #{fwd.1} parent=1 // pred_fallthru
      _
    // Predicated region
    $region54: #{fwd.1} parent=1 // pred_check
      _
    $region55: #{fwd.1} parent=1 // pred_check_branch
      %1604 = sbr.rel (0) target = $region57
    $region56: #{fwd.1} parent=1 // pred_region
      _
    $region57: #{fwd.1} parent=1 // pred_fallthru
      _
    %1605 = vsyncpa [#allocation3], 1
    %1606 = vsyncpa [#allocation5], 1
    %1607 = vsyncpa [#allocation8], 1
    %1608 = vsyncpa [#allocation11], 1

</llo_original>
